<compile_context>
chip_gen: v5e
topology: v5e:2x2
jax: 0.10.0
libtpu: 0.0.40
codegen_flags: <defaults>
</compile_context>

<pallas_src>
import functools

import jax
import jax.numpy as jnp
from jax.experimental import pallas as pl
from jax.experimental.pallas import tpu as pltpu


# Inputs to the mixing kernel can be fed as bf16 on v6e/v7x to halve the input
# DMA bytes (the o_ref accumulator stays f32).  Keep f32 on v5e (no bf16 VPU)
# and whenever ~1e-3 accuracy vs an f32 reference is required (self-test below).
_INPUT_DTYPE = jnp.float32


def _prod(shape):
    out = 1
    for s in shape:
        out *= int(s)
    return out


def _largest_divisor_leq(n, cap):
    for d in range(min(cap, n), 0, -1):
        if n % d == 0:
            return d
    return 1


# ----------------------------------------------------------------------------
# Pallas kernel: tiled complex channel mixing with Ci accumulation
# ----------------------------------------------------------------------------
def _spectral_mix_kernel(x_ref, w_ref, o_ref):
    """One (batch, mode, co) output block, accumulated over the ci grid axis.

    x_ref : (2, b_t, ci_t, m_t)   planar re/im retained-mode activations
                                  (channels on sublanes -> dense even for B=2)
    w_ref : (2, ci_t, co_t, m_t)  planar re/im spectral weights
    o_ref : (2, b_t, co_t, m_t)   planar re/im mixed modes; f32 resident
                                  accumulator across the ci grid axis
    """
    @pl.when(pl.program_id(3) == 0)
    def _():
        o_ref[...] = jnp.zeros_like(o_ref)

    b_t = x_ref.shape[1]
    ci_t = x_ref.shape[2]

    # One batch plane at a time, so the live accumulator is only
    # 2 * co_t * m_t f32 (<= 16 vregs with the co_tile*m_tile cap below).
    for b in range(b_t):                        # b_t small, static
        acc_r = o_ref[0, b]                     # (co_t, m_t)
        acc_i = o_ref[1, b]
        # Per-channel operands are loaded from VMEM inside each iteration so
        # per-iteration temporaries stay vreg-sized; the (1, m_t) row is
        # broadcast across the co sublanes directly in the multiply (no
        # (B, Ci, Co, M) broadcast intermediate is ever materialized).
        for i in range(ci_t):                   # static unrolled, ci_t == 8
            xr = x_ref[0, b, pl.ds(i, 1), :]    # (1, m_t)
            xi = x_ref[1, b, pl.ds(i, 1), :]
            wr = w_ref[0, i]                    # (co_t, m_t)
            wi = w_ref[1, i]
            acc_r = acc_r + xr * wr - xi * wi
            acc_i = acc_i + xr * wi + xi * wr
        o_ref[0, b] = acc_r
        o_ref[1, b] = acc_i


# ----------------------------------------------------------------------------
# Wrapper around pallas_call
# ----------------------------------------------------------------------------
def _spectral_mix(x_ri, w_ri):
    """x_ri: (2, B, C, Mtot), w_ri: (2, C, C, Mtot) -> (2, B, Cop, Mpad) f32."""
    _, B, C, Mtot = x_ri.shape

    Cip = -(-C // 8) * 8
    Cop = Cip
    ci_tile = 8

    # co_tile as large as the channel count allows (up to 32) to cut how many
    # times x is re-streamed from HBM; m_tile chosen jointly so the resident
    # per-plane accumulator (2*co_tile*m_tile*4 B) stays <= 64 KiB (16 vregs)
    # and the lane tile never drops below 256.
    if Cop % 32 == 0:
        co_tile, m_tile = 32, 256
    elif Cop % 16 == 0:
        co_tile, m_tile = 16, 512
    else:
        co_tile, m_tile = 8, 512

    Mpad = -(-Mtot // m_tile) * m_tile          # lane axis padded to m_tile

    n_m = Mpad // m_tile
    n_co = Cop // co_tile
    n_ci = Cip // ci_tile

    # Batch tile: bounds in-kernel unrolling / VMEM, and guarantees a >= 2-way
    # extent on the parallel grid axes when the problem is small (v7x: 2 TCs).
    b_tile = _largest_divisor_leq(B, 8)
    if n_m * n_co == 1 and B // b_tile < 2 and B >= 2:
        b_tile = _largest_divisor_leq(B, max(1, B // 2))
    n_b = B // b_tile

    # Zero-pad channels (to 8) and modes (to m_tile): padded entries contribute
    # exactly zero to the contraction and are sliced off afterwards.
    x_p = jnp.pad(x_ri, ((0, 0), (0, 0), (0, Cip - C), (0, Mpad - Mtot)))
    w_p = jnp.pad(w_ri, ((0, 0), (0, Cip - C), (0, Cop - C), (0, Mpad - Mtot)))
    x_p = x_p.astype(_INPUT_DTYPE)
    w_p = w_p.astype(_INPUT_DTYPE)

    x_blk = (2, b_tile, ci_tile, m_tile)
    w_blk = (2, ci_tile, co_tile, m_tile)
    o_blk = (2, b_tile, co_tile, m_tile)
    grid = (n_b, n_m, n_co, n_ci)

    # Double-buffered inputs + output block; derive the VMEM request so the
    # same tiling fits v5e/v6e (128 MiB) and v7x (64 MiB) with headroom.
    blk_bytes = 4 * (2 * _prod(x_blk) + 2 * _prod(w_blk) + 2 * _prod(o_blk))
    vmem_limit = int(min(64 * 1024 * 1024, max(32 * 1024 * 1024, 4 * blk_bytes)))

    itemsize = jnp.dtype(_INPUT_DTYPE).itemsize
    flops = 8 * B * Cip * Cop * Mpad
    bytes_accessed = (x_p.size * itemsize * n_co     # x re-read per co tile
                      + w_p.size * itemsize * n_b    # w re-read per batch tile
                      + 2 * B * Cop * Mpad * 4)      # f32 output written once

    # TODO(synk): for very large C (>= 64) and large B an MXU path (per-mode
    # (B x Ci) @ (Ci x Co) matmuls) would beat this VPU broadcast-multiply.
    return pl.pallas_call(
        _spectral_mix_kernel,
        grid=grid,
        in_specs=[
            pl.BlockSpec(x_blk, lambda b, m, co, ci: (0, b, ci, m)),
            pl.BlockSpec(w_blk, lambda b, m, co, ci: (0, ci, co, m)),
        ],
        out_specs=pl.BlockSpec(o_blk, lambda b, m, co, ci: (0, b, co, m)),
        out_shape=jax.ShapeDtypeStruct((2, B, Cop, Mpad), jnp.float32),
        compiler_params=pltpu.CompilerParams(
            dimension_semantics=("parallel", "parallel", "parallel", "arbitrary"),
            vmem_limit_bytes=vmem_limit,
        ),
        cost_estimate=pl.CostEstimate(
            flops=int(flops), transcendentals=0,
            bytes_accessed=int(bytes_accessed)),
    )(x_p, w_p)


# ----------------------------------------------------------------------------
# FourierLayer forward
# ----------------------------------------------------------------------------
@functools.partial(jax.jit, static_argnums=(3, 4))
def fourier_layer(x, weights1, weights2, modes1, modes2):
    """Forward pass of FourierLayer.  x: (B, C, H, W) float32 (NCHW)."""
    B, C, H, W = x.shape
    residual = x

    # TODO(synk): rfft2 / irfft2 stay in plain JAX (jnp.fft) — no Pallas FFT
    # primitive on TPU.
    x_ft = jnp.fft.rfft2(x)                       # (B, C, H, W//2+1) complex64
    h, w = x_ft.shape[-2], x_ft.shape[-1]
    w_out = w // 2 + 1                            # reproduces the reference quirk
    am1 = min(modes1, h)
    am2 = min(modes2, w_out)
    M = am1 * am2
    Mtot = 2 * M

    # Retained-mode regions, flattened and packed onto a single lane axis
    # (top | bottom), channels kept on the sublane-adjacent axis so the kernel
    # tiles are fully sublane-dense even for tiny batches.
    x_modes = jnp.concatenate(
        [x_ft[:, :, :am1, :am2].reshape(B, C, M),
         x_ft[:, :, h - am1:, :am2].reshape(B, C, M)], axis=-1)    # (B, C, 2M)
    w_modes = jnp.concatenate(
        [weights1[:, :, :am1, :am2].reshape(C, C, M),
         weights2[:, :, :am1, :am2].reshape(C, C, M)], axis=-1)    # (C, C, 2M)

    x_ri = jnp.stack([x_modes.real, x_modes.imag], axis=0).astype(jnp.float32)
    w_ri = jnp.stack([w_modes.real, w_modes.imag], axis=0).astype(jnp.float32)

    out_ri = _spectral_mix(x_ri, w_ri)            # (2, B, Cop, Mpad) f32

    out_c = out_ri[0, :, :C, :Mtot] + 1j * out_ri[1, :, :C, :Mtot]
    out_top = out_c[:, :, :M].reshape(B, C, am1, am2)
    out_bot = out_c[:, :, M:].reshape(B, C, am1, am2)

    # scatter into out_ft; the bottom write overwrites the overlap, matching
    # the PyTorch assignment order.
    out_ft = jnp.zeros((B, C, h, w_out), dtype=jnp.complex64)
    out_ft = out_ft.at[:, :, :am1, :am2].set(out_top.astype(jnp.complex64))
    out_ft = out_ft.at[:, :, h - am1:, :am2].set(out_bot.astype(jnp.complex64))

    y = jnp.fft.irfft2(out_ft, s=(H, W)).astype(jnp.float32)
    # residual add is left to XLA fusion (pure HBM-bound elementwise add)
    return y + residual


# ----------------------------------------------------------------------------
# Pure-JAX reference (mirrors the PyTorch forward exactly), for verification
# ----------------------------------------------------------------------------
def _reference(x, weights1, weights2, modes1, modes2):
    B, C, H, W = x.shape
    residual = x
    x_ft = jnp.fft.rfft2(x)
    h, w = x_ft.shape[-2], x_ft.shape[-1]
    out_ft = jnp.zeros((B, C, h, w // 2 + 1), dtype=jnp.complex64)
    am1 = min(modes1, h)
    am2 = min(modes2, w // 2 + 1)
    out_ft = out_ft.at[:, :, :am1, :am2].set(
        jnp.einsum('bixy,ioxy->boxy',
                   x_ft[:, :, :am1, :am2], weights1[:, :, :am1, :am2]))
    out_ft = out_ft.at[:, :, h - am1:, :am2].set(
        jnp.einsum('bixy,ioxy->boxy',
                   x_ft[:, :, h - am1:, :am2], weights2[:, :, :am1, :am2]))
    y = jnp.fft.irfft2(out_ft, s=(H, W)).astype(jnp.float32)
    return y + residual


# ----------------------------------------------------------------------------
if __name__ == "__main__":
    B, C, H, W = 2, 4, 16, 16
    modes1, modes2 = 6, 6

    key = jax.random.PRNGKey(0)
    kx, k1r, k1i, k2r, k2i = jax.random.split(key, 5)

    x = jax.random.normal(kx, (B, C, H, W), dtype=jnp.float32)

    scale = 1.0 / (C * C)
    w_shape = (C, C, modes1, modes2)
    weights1 = (scale * (jax.random.normal(k1r, w_shape)
                         + 1j * jax.random.normal(k1i, w_shape))).astype(jnp.complex64)
    weights2 = (scale * (jax.random.normal(k2r, w_shape)
                         + 1j * jax.random.normal(k2i, w_shape))).astype(jnp.complex64)

    out = fourier_layer(x, weights1, weights2, modes1, modes2)
    out = jax.block_until_ready(out)

    ref = _reference(x, weights1, weights2, modes1, modes2)
    assert out.shape == (B, C, H, W) and out.dtype == jnp.float32
    assert jnp.allclose(out, ref, atol=1e-3, rtol=1e-3), "mismatch vs reference"

    print("KERNEL_OK")
</pallas_src>

<mosaic_0001>
module attributes {stable_mosaic.version = 11 : i64} {
  func.func @_spectral_mix_kernel(%arg0: i32, %arg1: i32, %arg2: i32, %arg3: i32, %arg4: memref<2x1x8x512xf32, #tpu.memory_space<vmem>>, %arg5: memref<2x8x8x512xf32, #tpu.memory_space<vmem>>, %arg6: memref<2x1x8x512xf32, #tpu.memory_space<vmem>>) attributes {dimension_semantics = [#tpu.dimension_semantics<parallel>, #tpu.dimension_semantics<parallel>, #tpu.dimension_semantics<parallel>, #tpu.dimension_semantics<arbitrary>], iteration_bounds = array<i64: 2, 1, 1, 1>, scalar_prefetch = 0 : i64, scratch_operands = 0 : i64, tpu.core_type = #tpu.core_type<tc>, window_params = [{transform_indices = @transform_0, window_bounds = array<i64: 2, 1, 8, 512>}, {transform_indices = @transform_1, window_bounds = array<i64: 2, 8, 8, 512>}, {transform_indices = @transform_2, window_bounds = array<i64: 2, 1, 8, 512>}]} {
    %c0_i32 = arith.constant 0 : i32
    %0 = arith.cmpi eq, %arg3, %c0_i32 : i32
    %1 = arith.extui %0 : i1 to i32
    %c0_i32_0 = arith.constant 0 : i32
    %2 = arith.cmpi ne, %1, %c0_i32_0 : i32
    scf.if %2 {
      %cst = arith.constant 0.000000e+00 : f32
      %173 = vector.broadcast %cst : f32 to vector<2x1x8x512xf32>
      %c0_137 = arith.constant 0 : index
      %c0_138 = arith.constant 0 : index
      %c0_139 = arith.constant 0 : index
      %c0_140 = arith.constant 0 : index
      %174 = vector.load %arg6[%c0_137, %c0_138, %c0_139, %c0_140] : memref<2x1x8x512xf32, #tpu.memory_space<vmem>>, vector<2x1x8x512xf32>
      tpu.vector_store %arg6[%c0_137, %c0_138, %c0_139, %c0_140], %173 {strides = array<i32>} : memref<2x1x8x512xf32, #tpu.memory_space<vmem>>, vector<2x1x8x512xf32>,
    } else {
    }
    %c0 = arith.constant 0 : index
    %c0_1 = arith.constant 0 : index
    %c0_2 = arith.constant 0 : index
    %c0_3 = arith.constant 0 : index
    %3 = vector.load %arg6[%c0, %c0_1, %c0_2, %c0_3] : memref<2x1x8x512xf32, #tpu.memory_space<vmem>>, vector<1x1x8x512xf32>
    %4 = vector.shape_cast %3 : vector<1x1x8x512xf32> to vector<8x512xf32>
    %c1 = arith.constant 1 : index
    %c0_4 = arith.constant 0 : index
    %c0_5 = arith.constant 0 : index
    %c0_6 = arith.constant 0 : index
    %5 = vector.load %arg6[%c1, %c0_4, %c0_5, %c0_6] : memref<2x1x8x512xf32, #tpu.memory_space<vmem>>, vector<1x1x8x512xf32>
    %6 = vector.shape_cast %5 : vector<1x1x8x512xf32> to vector<8x512xf32>
    %c0_7 = arith.constant 0 : index
    %c0_8 = arith.constant 0 : index
    %c0_9 = arith.constant 0 : index
    %c0_10 = arith.constant 0 : index
    %7 = vector.load %arg4[%c0_7, %c0_8, %c0_9, %c0_10] : memref<2x1x8x512xf32, #tpu.memory_space<vmem>>, vector<1x1x1x512xf32>
    %8 = vector.shape_cast %7 : vector<1x1x1x512xf32> to vector<1x512xf32>
    %c1_11 = arith.constant 1 : index
    %c0_12 = arith.constant 0 : index
    %c0_13 = arith.constant 0 : index
    %c0_14 = arith.constant 0 : index
    %9 = vector.load %arg4[%c1_11, %c0_12, %c0_13, %c0_14] : memref<2x1x8x512xf32, #tpu.memory_space<vmem>>, vector<1x1x1x512xf32>
    %10 = vector.shape_cast %9 : vector<1x1x1x512xf32> to vector<1x512xf32>
    %c0_15 = arith.constant 0 : index
    %c0_16 = arith.constant 0 : index
    %c0_17 = arith.constant 0 : index
    %c0_18 = arith.constant 0 : index
    %11 = vector.load %arg5[%c0_15, %c0_16, %c0_17, %c0_18] : memref<2x8x8x512xf32, #tpu.memory_space<vmem>>, vector<1x1x8x512xf32>
    %12 = vector.shape_cast %11 : vector<1x1x8x512xf32> to vector<8x512xf32>
    %c1_19 = arith.constant 1 : index
    %c0_20 = arith.constant 0 : index
    %c0_21 = arith.constant 0 : index
    %c0_22 = arith.constant 0 : index
    %13 = vector.load %arg5[%c1_19, %c0_20, %c0_21, %c0_22] : memref<2x8x8x512xf32, #tpu.memory_space<vmem>>, vector<1x1x8x512xf32>
    %14 = vector.shape_cast %13 : vector<1x1x8x512xf32> to vector<8x512xf32>
    %15 = vector.broadcast %8 : vector<1x512xf32> to vector<8x512xf32>
    %16 = arith.mulf %15, %12 : vector<8x512xf32>
    %17 = arith.addf %4, %16 : vector<8x512xf32>
    %18 = vector.broadcast %10 : vector<1x512xf32> to vector<8x512xf32>
    %19 = arith.mulf %18, %14 : vector<8x512xf32>
    %20 = arith.subf %17, %19 : vector<8x512xf32>
    %21 = vector.broadcast %8 : vector<1x512xf32> to vector<8x512xf32>
    %22 = arith.mulf %21, %14 : vector<8x512xf32>
    %23 = arith.addf %6, %22 : vector<8x512xf32>
    %24 = vector.broadcast %10 : vector<1x512xf32> to vector<8x512xf32>
    %25 = arith.mulf %24, %12 : vector<8x512xf32>
    %26 = arith.addf %23, %25 : vector<8x512xf32>
    %c0_23 = arith.constant 0 : index
    %c0_24 = arith.constant 0 : index
    %c1_25 = arith.constant 1 : index
    %c0_26 = arith.constant 0 : index
    %27 = vector.load %arg4[%c0_23, %c0_24, %c1_25, %c0_26] : memref<2x1x8x512xf32, #tpu.memory_space<vmem>>, vector<1x1x1x512xf32>
    %28 = vector.shape_cast %27 : vector<1x1x1x512xf32> to vector<1x512xf32>
    %c1_27 = arith.constant 1 : index
    %c0_28 = arith.constant 0 : index
    %c1_29 = arith.constant 1 : index
    %c0_30 = arith.constant 0 : index
    %29 = vector.load %arg4[%c1_27, %c0_28, %c1_29, %c0_30] : memref<2x1x8x512xf32, #tpu.memory_space<vmem>>, vector<1x1x1x512xf32>
    %30 = vector.shape_cast %29 : vector<1x1x1x512xf32> to vector<1x512xf32>
    %c0_31 = arith.constant 0 : index
    %c1_32 = arith.constant 1 : index
    %c0_33 = arith.constant 0 : index
    %c0_34 = arith.constant 0 : index
    %31 = vector.load %arg5[%c0_31, %c1_32, %c0_33, %c0_34] : memref<2x8x8x512xf32, #tpu.memory_space<vmem>>, vector<1x1x8x512xf32>
    %32 = vector.shape_cast %31 : vector<1x1x8x512xf32> to vector<8x512xf32>
    %c1_35 = arith.constant 1 : index
    %c1_36 = arith.constant 1 : index
    %c0_37 = arith.constant 0 : index
    %c0_38 = arith.constant 0 : index
    %33 = vector.load %arg5[%c1_35, %c1_36, %c0_37, %c0_38] : memref<2x8x8x512xf32, #tpu.memory_space<vmem>>, vector<1x1x8x512xf32>
    %34 = vector.shape_cast %33 : vector<1x1x8x512xf32> to vector<8x512xf32>
    %35 = vector.broadcast %28 : vector<1x512xf32> to vector<8x512xf32>
    %36 = arith.mulf %35, %32 : vector<8x512xf32>
    %37 = arith.addf %20, %36 : vector<8x512xf32>
    %38 = vector.broadcast %30 : vector<1x512xf32> to vector<8x512xf32>
    %39 = arith.mulf %38, %34 : vector<8x512xf32>
    %40 = arith.subf %37, %39 : vector<8x512xf32>
    %41 = vector.broadcast %28 : vector<1x512xf32> to vector<8x512xf32>
    %42 = arith.mulf %41, %34 : vector<8x512xf32>
    %43 = arith.addf %26, %42 : vector<8x512xf32>
    %44 = vector.broadcast %30 : vector<1x512xf32> to vector<8x512xf32>
    %45 = arith.mulf %44, %32 : vector<8x512xf32>
    %46 = arith.addf %43, %45 : vector<8x512xf32>
    %c0_39 = arith.constant 0 : index
    %c0_40 = arith.constant 0 : index
    %c2 = arith.constant 2 : index
    %c0_41 = arith.constant 0 : index
    %47 = vector.load %arg4[%c0_39, %c0_40, %c2, %c0_41] : memref<2x1x8x512xf32, #tpu.memory_space<vmem>>, vector<1x1x1x512xf32>
    %48 = vector.shape_cast %47 : vector<1x1x1x512xf32> to vector<1x512xf32>
    %c1_42 = arith.constant 1 : index
    %c0_43 = arith.constant 0 : index
    %c2_44 = arith.constant 2 : index
    %c0_45 = arith.constant 0 : index
    %49 = vector.load %arg4[%c1_42, %c0_43, %c2_44, %c0_45] : memref<2x1x8x512xf32, #tpu.memory_space<vmem>>, vector<1x1x1x512xf32>
    %50 = vector.shape_cast %49 : vector<1x1x1x512xf32> to vector<1x512xf32>
    %c0_46 = arith.constant 0 : index
    %c2_47 = arith.constant 2 : index
    %c0_48 = arith.constant 0 : index
    %c0_49 = arith.constant 0 : index
    %51 = vector.load %arg5[%c0_46, %c2_47, %c0_48, %c0_49] : memref<2x8x8x512xf32, #tpu.memory_space<vmem>>, vector<1x1x8x512xf32>
    %52 = vector.shape_cast %51 : vector<1x1x8x512xf32> to vector<8x512xf32>
    %c1_50 = arith.constant 1 : index
    %c2_51 = arith.constant 2 : index
    %c0_52 = arith.constant 0 : index
    %c0_53 = arith.constant 0 : index
    %53 = vector.load %arg5[%c1_50, %c2_51, %c0_52, %c0_53] : memref<2x8x8x512xf32, #tpu.memory_space<vmem>>, vector<1x1x8x512xf32>
    %54 = vector.shape_cast %53 : vector<1x1x8x512xf32> to vector<8x512xf32>
    %55 = vector.broadcast %48 : vector<1x512xf32> to vector<8x512xf32>
    %56 = arith.mulf %55, %52 : vector<8x512xf32>
    %57 = arith.addf %40, %56 : vector<8x512xf32>
    %58 = vector.broadcast %50 : vector<1x512xf32> to vector<8x512xf32>
    %59 = arith.mulf %58, %54 : vector<8x512xf32>
    %60 = arith.subf %57, %59 : vector<8x512xf32>
    %61 = vector.broadcast %48 : vector<1x512xf32> to vector<8x512xf32>
    %62 = arith.mulf %61, %54 : vector<8x512xf32>
    %63 = arith.addf %46, %62 : vector<8x512xf32>
    %64 = vector.broadcast %50 : vector<1x512xf32> to vector<8x512xf32>
    %65 = arith.mulf %64, %52 : vector<8x512xf32>
    %66 = arith.addf %63, %65 : vector<8x512xf32>
    %c0_54 = arith.constant 0 : index
    %c0_55 = arith.constant 0 : index
    %c3 = arith.constant 3 : index
    %c0_56 = arith.constant 0 : index
    %67 = vector.load %arg4[%c0_54, %c0_55, %c3, %c0_56] : memref<2x1x8x512xf32, #tpu.memory_space<vmem>>, vector<1x1x1x512xf32>
    %68 = vector.shape_cast %67 : vector<1x1x1x512xf32> to vector<1x512xf32>
    %c1_57 = arith.constant 1 : index
    %c0_58 = arith.constant 0 : index
    %c3_59 = arith.constant 3 : index
    %c0_60 = arith.constant 0 : index
    %69 = vector.load %arg4[%c1_57, %c0_58, %c3_59, %c0_60] : memref<2x1x8x512xf32, #tpu.memory_space<vmem>>, vector<1x1x1x512xf32>
    %70 = vector.shape_cast %69 : vector<1x1x1x512xf32> to vector<1x512xf32>
    %c0_61 = arith.constant 0 : index
    %c3_62 = arith.constant 3 : index
    %c0_63 = arith.constant 0 : index
    %c0_64 = arith.constant 0 : index
    %71 = vector.load %arg5[%c0_61, %c3_62, %c0_63, %c0_64] : memref<2x8x8x512xf32, #tpu.memory_space<vmem>>, vector<1x1x8x512xf32>
    %72 = vector.shape_cast %71 : vector<1x1x8x512xf32> to vector<8x512xf32>
    %c1_65 = arith.constant 1 : index
    %c3_66 = arith.constant 3 : index
    %c0_67 = arith.constant 0 : index
    %c0_68 = arith.constant 0 : index
    %73 = vector.load %arg5[%c1_65, %c3_66, %c0_67, %c0_68] : memref<2x8x8x512xf32, #tpu.memory_space<vmem>>, vector<1x1x8x512xf32>
    %74 = vector.shape_cast %73 : vector<1x1x8x512xf32> to vector<8x512xf32>
    %75 = vector.broadcast %68 : vector<1x512xf32> to vector<8x512xf32>
    %76 = arith.mulf %75, %72 : vector<8x512xf32>
    %77 = arith.addf %60, %76 : vector<8x512xf32>
    %78 = vector.broadcast %70 : vector<1x512xf32> to vector<8x512xf32>
    %79 = arith.mulf %78, %74 : vector<8x512xf32>
    %80 = arith.subf %77, %79 : vector<8x512xf32>
    %81 = vector.broadcast %68 : vector<1x512xf32> to vector<8x512xf32>
    %82 = arith.mulf %81, %74 : vector<8x512xf32>
    %83 = arith.addf %66, %82 : vector<8x512xf32>
    %84 = vector.broadcast %70 : vector<1x512xf32> to vector<8x512xf32>
    %85 = arith.mulf %84, %72 : vector<8x512xf32>
    %86 = arith.addf %83, %85 : vector<8x512xf32>
    %c0_69 = arith.constant 0 : index
    %c0_70 = arith.constant 0 : index
    %c4 = arith.constant 4 : index
    %c0_71 = arith.constant 0 : index
    %87 = vector.load %arg4[%c0_69, %c0_70, %c4, %c0_71] : memref<2x1x8x512xf32, #tpu.memory_space<vmem>>, vector<1x1x1x512xf32>
    %88 = vector.shape_cast %87 : vector<1x1x1x512xf32> to vector<1x512xf32>
    %c1_72 = arith.constant 1 : index
    %c0_73 = arith.constant 0 : index
    %c4_74 = arith.constant 4 : index
    %c0_75 = arith.constant 0 : index
    %89 = vector.load %arg4[%c1_72, %c0_73, %c4_74, %c0_75] : memref<2x1x8x512xf32, #tpu.memory_space<vmem>>, vector<1x1x1x512xf32>
    %90 = vector.shape_cast %89 : vector<1x1x1x512xf32> to vector<1x512xf32>
    %c0_76 = arith.constant 0 : index
    %c4_77 = arith.constant 4 : index
    %c0_78 = arith.constant 0 : index
    %c0_79 = arith.constant 0 : index
    %91 = vector.load %arg5[%c0_76, %c4_77, %c0_78, %c0_79] : memref<2x8x8x512xf32, #tpu.memory_space<vmem>>, vector<1x1x8x512xf32>
    %92 = vector.shape_cast %91 : vector<1x1x8x512xf32> to vector<8x512xf32>
    %c1_80 = arith.constant 1 : index
    %c4_81 = arith.constant 4 : index
    %c0_82 = arith.constant 0 : index
    %c0_83 = arith.constant 0 : index
    %93 = vector.load %arg5[%c1_80, %c4_81, %c0_82, %c0_83] : memref<2x8x8x512xf32, #tpu.memory_space<vmem>>, vector<1x1x8x512xf32>
    %94 = vector.shape_cast %93 : vector<1x1x8x512xf32> to vector<8x512xf32>
    %95 = vector.broadcast %88 : vector<1x512xf32> to vector<8x512xf32>
    %96 = arith.mulf %95, %92 : vector<8x512xf32>
    %97 = arith.addf %80, %96 : vector<8x512xf32>
    %98 = vector.broadcast %90 : vector<1x512xf32> to vector<8x512xf32>
    %99 = arith.mulf %98, %94 : vector<8x512xf32>
    %100 = arith.subf %97, %99 : vector<8x512xf32>
    %101 = vector.broadcast %88 : vector<1x512xf32> to vector<8x512xf32>
    %102 = arith.mulf %101, %94 : vector<8x512xf32>
    %103 = arith.addf %86, %102 : vector<8x512xf32>
    %104 = vector.broadcast %90 : vector<1x512xf32> to vector<8x512xf32>
    %105 = arith.mulf %104, %92 : vector<8x512xf32>
    %106 = arith.addf %103, %105 : vector<8x512xf32>
    %c0_84 = arith.constant 0 : index
    %c0_85 = arith.constant 0 : index
    %c5 = arith.constant 5 : index
    %c0_86 = arith.constant 0 : index
    %107 = vector.load %arg4[%c0_84, %c0_85, %c5, %c0_86] : memref<2x1x8x512xf32, #tpu.memory_space<vmem>>, vector<1x1x1x512xf32>
    %108 = vector.shape_cast %107 : vector<1x1x1x512xf32> to vector<1x512xf32>
    %c1_87 = arith.constant 1 : index
    %c0_88 = arith.constant 0 : index
    %c5_89 = arith.constant 5 : index
    %c0_90 = arith.constant 0 : index
    %109 = vector.load %arg4[%c1_87, %c0_88, %c5_89, %c0_90] : memref<2x1x8x512xf32, #tpu.memory_space<vmem>>, vector<1x1x1x512xf32>
    %110 = vector.shape_cast %109 : vector<1x1x1x512xf32> to vector<1x512xf32>
    %c0_91 = arith.constant 0 : index
    %c5_92 = arith.constant 5 : index
    %c0_93 = arith.constant 0 : index
    %c0_94 = arith.constant 0 : index
    %111 = vector.load %arg5[%c0_91, %c5_92, %c0_93, %c0_94] : memref<2x8x8x512xf32, #tpu.memory_space<vmem>>, vector<1x1x8x512xf32>
    %112 = vector.shape_cast %111 : vector<1x1x8x512xf32> to vector<8x512xf32>
    %c1_95 = arith.constant 1 : index
    %c5_96 = arith.constant 5 : index
    %c0_97 = arith.constant 0 : index
    %c0_98 = arith.constant 0 : index
    %113 = vector.load %arg5[%c1_95, %c5_96, %c0_97, %c0_98] : memref<2x8x8x512xf32, #tpu.memory_space<vmem>>, vector<1x1x8x512xf32>
    %114 = vector.shape_cast %113 : vector<1x1x8x512xf32> to vector<8x512xf32>
    %115 = vector.broadcast %108 : vector<1x512xf32> to vector<8x512xf32>
    %116 = arith.mulf %115, %112 : vector<8x512xf32>
    %117 = arith.addf %100, %116 : vector<8x512xf32>
    %118 = vector.broadcast %110 : vector<1x512xf32> to vector<8x512xf32>
    %119 = arith.mulf %118, %114 : vector<8x512xf32>
    %120 = arith.subf %117, %119 : vector<8x512xf32>
    %121 = vector.broadcast %108 : vector<1x512xf32> to vector<8x512xf32>
    %122 = arith.mulf %121, %114 : vector<8x512xf32>
    %123 = arith.addf %106, %122 : vector<8x512xf32>
    %124 = vector.broadcast %110 : vector<1x512xf32> to vector<8x512xf32>
    %125 = arith.mulf %124, %112 : vector<8x512xf32>
    %126 = arith.addf %123, %125 : vector<8x512xf32>
    %c0_99 = arith.constant 0 : index
    %c0_100 = arith.constant 0 : index
    %c6 = arith.constant 6 : index
    %c0_101 = arith.constant 0 : index
    %127 = vector.load %arg4[%c0_99, %c0_100, %c6, %c0_101] : memref<2x1x8x512xf32, #tpu.memory_space<vmem>>, vector<1x1x1x512xf32>
    %128 = vector.shape_cast %127 : vector<1x1x1x512xf32> to vector<1x512xf32>
    %c1_102 = arith.constant 1 : index
    %c0_103 = arith.constant 0 : index
    %c6_104 = arith.constant 6 : index
    %c0_105 = arith.constant 0 : index
    %129 = vector.load %arg4[%c1_102, %c0_103, %c6_104, %c0_105] : memref<2x1x8x512xf32, #tpu.memory_space<vmem>>, vector<1x1x1x512xf32>
    %130 = vector.shape_cast %129 : vector<1x1x1x512xf32> to vector<1x512xf32>
    %c0_106 = arith.constant 0 : index
    %c6_107 = arith.constant 6 : index
    %c0_108 = arith.constant 0 : index
    %c0_109 = arith.constant 0 : index
    %131 = vector.load %arg5[%c0_106, %c6_107, %c0_108, %c0_109] : memref<2x8x8x512xf32, #tpu.memory_space<vmem>>, vector<1x1x8x512xf32>
    %132 = vector.shape_cast %131 : vector<1x1x8x512xf32> to vector<8x512xf32>
    %c1_110 = arith.constant 1 : index
    %c6_111 = arith.constant 6 : index
    %c0_112 = arith.constant 0 : index
    %c0_113 = arith.constant 0 : index
    %133 = vector.load %arg5[%c1_110, %c6_111, %c0_112, %c0_113] : memref<2x8x8x512xf32, #tpu.memory_space<vmem>>, vector<1x1x8x512xf32>
    %134 = vector.shape_cast %133 : vector<1x1x8x512xf32> to vector<8x512xf32>
    %135 = vector.broadcast %128 : vector<1x512xf32> to vector<8x512xf32>
    %136 = arith.mulf %135, %132 : vector<8x512xf32>
    %137 = arith.addf %120, %136 : vector<8x512xf32>
    %138 = vector.broadcast %130 : vector<1x512xf32> to vector<8x512xf32>
    %139 = arith.mulf %138, %134 : vector<8x512xf32>
    %140 = arith.subf %137, %139 : vector<8x512xf32>
    %141 = vector.broadcast %128 : vector<1x512xf32> to vector<8x512xf32>
    %142 = arith.mulf %141, %134 : vector<8x512xf32>
    %143 = arith.addf %126, %142 : vector<8x512xf32>
    %144 = vector.broadcast %130 : vector<1x512xf32> to vector<8x512xf32>
    %145 = arith.mulf %144, %132 : vector<8x512xf32>
    %146 = arith.addf %143, %145 : vector<8x512xf32>
    %c0_114 = arith.constant 0 : index
    %c0_115 = arith.constant 0 : index
    %c7 = arith.constant 7 : index
    %c0_116 = arith.constant 0 : index
    %147 = vector.load %arg4[%c0_114, %c0_115, %c7, %c0_116] : memref<2x1x8x512xf32, #tpu.memory_space<vmem>>, vector<1x1x1x512xf32>
    %148 = vector.shape_cast %147 : vector<1x1x1x512xf32> to vector<1x512xf32>
    %c1_117 = arith.constant 1 : index
    %c0_118 = arith.constant 0 : index
    %c7_119 = arith.constant 7 : index
    %c0_120 = arith.constant 0 : index
    %149 = vector.load %arg4[%c1_117, %c0_118, %c7_119, %c0_120] : memref<2x1x8x512xf32, #tpu.memory_space<vmem>>, vector<1x1x1x512xf32>
    %150 = vector.shape_cast %149 : vector<1x1x1x512xf32> to vector<1x512xf32>
    %c0_121 = arith.constant 0 : index
    %c7_122 = arith.constant 7 : index
    %c0_123 = arith.constant 0 : index
    %c0_124 = arith.constant 0 : index
    %151 = vector.load %arg5[%c0_121, %c7_122, %c0_123, %c0_124] : memref<2x8x8x512xf32, #tpu.memory_space<vmem>>, vector<1x1x8x512xf32>
    %152 = vector.shape_cast %151 : vector<1x1x8x512xf32> to vector<8x512xf32>
    %c1_125 = arith.constant 1 : index
    %c7_126 = arith.constant 7 : index
    %c0_127 = arith.constant 0 : index
    %c0_128 = arith.constant 0 : index
    %153 = vector.load %arg5[%c1_125, %c7_126, %c0_127, %c0_128] : memref<2x8x8x512xf32, #tpu.memory_space<vmem>>, vector<1x1x8x512xf32>
    %154 = vector.shape_cast %153 : vector<1x1x8x512xf32> to vector<8x512xf32>
    %155 = vector.broadcast %148 : vector<1x512xf32> to vector<8x512xf32>
    %156 = arith.mulf %155, %152 : vector<8x512xf32>
    %157 = arith.addf %140, %156 : vector<8x512xf32>
    %158 = vector.broadcast %150 : vector<1x512xf32> to vector<8x512xf32>
    %159 = arith.mulf %158, %154 : vector<8x512xf32>
    %160 = arith.subf %157, %159 : vector<8x512xf32>
    %161 = vector.broadcast %148 : vector<1x512xf32> to vector<8x512xf32>
    %162 = arith.mulf %161, %154 : vector<8x512xf32>
    %163 = arith.addf %146, %162 : vector<8x512xf32>
    %164 = vector.broadcast %150 : vector<1x512xf32> to vector<8x512xf32>
    %165 = arith.mulf %164, %152 : vector<8x512xf32>
    %166 = arith.addf %163, %165 : vector<8x512xf32>
    %c0_129 = arith.constant 0 : index
    %c0_130 = arith.constant 0 : index
    %c0_131 = arith.constant 0 : index
    %c0_132 = arith.constant 0 : index
    %167 = vector.load %arg6[%c0_129, %c0_130, %c0_131, %c0_132] : memref<2x1x8x512xf32, #tpu.memory_space<vmem>>, vector<1x1x8x512xf32>
    %168 = vector.shape_cast %167 : vector<1x1x8x512xf32> to vector<8x512xf32>
    %169 = vector.shape_cast %160 : vector<8x512xf32> to vector<1x1x8x512xf32>
    tpu.vector_store %arg6[%c0_129, %c0_130, %c0_131, %c0_132], %169 {strides = array<i32>} : memref<2x1x8x512xf32, #tpu.memory_space<vmem>>, vector<1x1x8x512xf32>,
    %c1_133 = arith.constant 1 : index
    %c0_134 = arith.constant 0 : index
    %c0_135 = arith.constant 0 : index
    %c0_136 = arith.constant 0 : index
    %170 = vector.load %arg6[%c1_133, %c0_134, %c0_135, %c0_136] : memref<2x1x8x512xf32, #tpu.memory_space<vmem>>, vector<1x1x8x512xf32>
    %171 = vector.shape_cast %170 : vector<1x1x8x512xf32> to vector<8x512xf32>
    %172 = vector.shape_cast %166 : vector<8x512xf32> to vector<1x1x8x512xf32>
    tpu.vector_store %arg6[%c1_133, %c0_134, %c0_135, %c0_136], %172 {strides = array<i32>} : memref<2x1x8x512xf32, #tpu.memory_space<vmem>>, vector<1x1x8x512xf32>,
    return
  }
  func.func @transform_0(%arg0: i32, %arg1: i32, %arg2: i32, %arg3: i32) -> (i32, i32, i32, i32) {
    %c0_i32 = arith.constant 0 : i32
    %c0_i32_0 = arith.constant 0 : i32
    return %c0_i32, %arg0, %arg3, %arg1 : i32, i32, i32, i32
  }
  func.func @transform_1(%arg0: i32, %arg1: i32, %arg2: i32, %arg3: i32) -> (i32, i32, i32, i32) {
    %c0_i32 = arith.constant 0 : i32
    %c0_i32_0 = arith.constant 0 : i32
    return %c0_i32, %arg3, %arg2, %arg1 : i32, i32, i32, i32
  }
  func.func @transform_2(%arg0: i32, %arg1: i32, %arg2: i32, %arg3: i32) -> (i32, i32, i32, i32) {
    %c0_i32 = arith.constant 0 : i32
    %c0_i32_0 = arith.constant 0 : i32
    return %c0_i32, %arg0, %arg2, %arg1 : i32, i32, i32, i32
  }
}

</mosaic_0001>

<llo_original>
// kernel: custom-call.1
$region0: #{custom-call.1}
  %s0 = inlined_call_operand.hbm [shape: c64[4,4,6,6], index: 0, kind: input, shape index: {}]
  %s1 = inlined_call_operand.vmem [shape: f32[4,4,6,6], index: 1, kind: output, shape index: {}]
  %s2 = scalar_lea.hbm %s0, 96
  $region1: #{custom-call.1} parent=0
    #allocation0 [shape = 's32[1]{0}', space=sflag, size = 0x4, scoped, tag = 'scoped memory for custom-call.1']
    %3 = vsyncpa [#allocation0], 0
    %s5 = sshll.u32 %s2, 4
    %s6 = int_to_ptr.hbm [resolvable:$true] %s5
    %s7 = sshll.u32 %s1, 4
    %s8 = int_to_ptr.vmem [resolvable:$true] %s7
    %10 = dma.hbm_to_vmem [thread:$0]  %s6, 1536, %s8, [#allocation0]
    %12 = dma.done [#allocation0], 1536
    %13 = vsyncpa [#allocation0], 1

// kernel: custom-call
$region0: #{custom-call}
  %s0 = inlined_call_operand.hbm [shape: c64[4,4,6,6], index: 0, kind: input, shape index: {}]
  %s1 = inlined_call_operand.vmem [shape: f32[4,4,6,6], index: 1, kind: output, shape index: {}]
  $region1: #{custom-call} parent=0
    #allocation0 [shape = 's32[1]{0}', space=sflag, size = 0x4, scoped, tag = 'scoped memory for custom-call']
    %2 = vsyncpa [#allocation0], 0
    %s4 = sshll.u32 %s0, 4
    %s5 = int_to_ptr.hbm [resolvable:$true] %s4
    %s6 = sshll.u32 %s1, 4
    %s7 = int_to_ptr.vmem [resolvable:$true] %s6
    %9 = dma.hbm_to_vmem [thread:$0]  %s5, 1536, %s7, [#allocation0]
    %11 = dma.done [#allocation0], 1536
    %12 = vsyncpa [#allocation0], 1

// kernel: reverse.1
$region0: #{reverse.1}
  %s0 = inlined_call_operand.vmem [shape: f32[2,4,16,7], index: 0, kind: input, shape index: {}]
  %s1 = inlined_call_operand.vmem [shape: f32[2,4,16,7], index: 1, kind: output, shape index: {}]
  $region1: #{reverse.1} parent=0
    #allocation0 [shape = 'u8[65536]{0}', space=vmem, size = 0x10000, scoped, tag = 'operand span for operand 0']
    #allocation1 [shape = 'u8[32768]{0}', space=vmem, size = 0x8000, scoped, tag = 'operand span for operand 1']
    %s2 = scalar_lea.vmem [#allocation0], 8
    // Predicated region
    $region2: #{reverse.1} parent=1 // pred_check
      _
    $region3: #{reverse.1} parent=1 // pred_check_branch
      %4 = sbr.rel (0) target = $region5
    $region4: #{reverse.1} parent=1 // pred_region
      // Predicated region
      $region6: #{reverse.1} parent=4 // pred_check
        _
      $region7: #{reverse.1} parent=4 // pred_check_branch
        %6 = sbr.rel (0) target = $region9
      $region8: #{reverse.1} parent=4 // pred_region
        // Predicated region
        $region21: #{reverse.1} parent=8 // pred_check
          _
        $region22: #{reverse.1} parent=8 // pred_check_branch
          %36 = sbr.rel (0) target = $region24
        $region23: #{reverse.1} parent=8 // pred_region
          loop: start=0, step=1, limit=1
          $region25: #{reverse.1} parent=23 // loop_pre_header
            _
          $region26: #{reverse.1} parent=23 // loop_header
            %s38 = sphi 0, %s42
            %p39 = scmp.ge.s32.totalorder %s38, 1
            %s43 = sphi %s0, %s0
            %s44 = sphi %s2, %s2
          $region27: #{reverse.1} parent=23 // loop_header_branch
            %41 = sbr.rel (%p39) target = $region31
          $region28: #{reverse.1} parent=23 // loop_body
            %v45 = vld [vmem:[%s43] sm:$0xff]
            %46 = vst [vmem:[%s44] sm:$0xff] %v45
            %v47 = vld [vmem:[%s43 + $0x8] sm:$0xff]
            %48 = vst [vmem:[%s44 + $0x10] sm:$0xff] %v47
            %v49 = vld [vmem:[%s43 + $0x10] sm:$0xff]
            %50 = vst [vmem:[%s44 + $0x20] sm:$0xff] %v49
            %v51 = vld [vmem:[%s43 + $0x18] sm:$0xff]
            %52 = vst [vmem:[%s44 + $0x30] sm:$0xff] %v51
            %v53 = vld [vmem:[%s43 + $0x20] sm:$0xff]
            %54 = vst [vmem:[%s44 + $0x40] sm:$0xff] %v53
            %v55 = vld [vmem:[%s43 + $0x28] sm:$0xff]
            %56 = vst [vmem:[%s44 + $0x50] sm:$0xff] %v55
            %v57 = vld [vmem:[%s43 + $0x30] sm:$0xff]
            %58 = vst [vmem:[%s44 + $0x60] sm:$0xff] %v57
            %v59 = vld [vmem:[%s43 + $0x38] sm:$0xff]
            %60 = vst [vmem:[%s44 + $0x70] sm:$0xff] %v59
          $region29: #{reverse.1} parent=23 // loop_footer
            %s42 = sadd.s32 1, %s38
          $region30: #{reverse.1} parent=23 // loop_footer_branch
            %37 = sbr.rel target = $region26
          $region31: #{reverse.1} parent=23 // loop_exit
            _
        $region24: #{reverse.1} parent=8 // pred_fallthru
          _
        // Predicated region
        $region32: #{reverse.1} parent=8 // pred_check
          _
        $region33: #{reverse.1} parent=8 // pred_check_branch
          %62 = sbr.rel target = $region35
        $region34: #{reverse.1} parent=8 // pred_region
          _
        $region35: #{reverse.1} parent=8 // pred_fallthru
          _
      $region9: #{reverse.1} parent=4 // pred_fallthru
        _
      // Predicated region
      $region10: #{reverse.1} parent=4 // pred_check
        _
      $region11: #{reverse.1} parent=4 // pred_check_branch
        %8 = sbr.rel target = $region13
      $region12: #{reverse.1} parent=4 // pred_region
        %s10 = ssub.s32 256, 1
        loop: start=0, step=1, limit=1
        $region14: #{reverse.1} parent=12 // loop_pre_header
          _
        $region15: #{reverse.1} parent=12 // loop_header
          %s12 = sphi 0, %s16
          %p13 = scmp.ge.s32.totalorder %s12, 1
          %s17 = sphi %s0, %s0
          %s18 = sphi %s2, %s2
        $region16: #{reverse.1} parent=12 // loop_header_branch
          %15 = sbr.rel (%p13) target = $region20
        $region17: #{reverse.1} parent=12 // loop_body
          %v19 = vld [vmem:[%s17] sm:%s10]
          %20 = vst [vmem:[%s18] sm:%s10] %v19
          %v21 = vld [vmem:[%s17 + $0x8] sm:%s10]
          %22 = vst [vmem:[%s18 + $0x10] sm:%s10] %v21
          %v23 = vld [vmem:[%s17 + $0x10] sm:%s10]
          %24 = vst [vmem:[%s18 + $0x20] sm:%s10] %v23
          %v25 = vld [vmem:[%s17 + $0x18] sm:%s10]
          %26 = vst [vmem:[%s18 + $0x30] sm:%s10] %v25
          %v27 = vld [vmem:[%s17 + $0x20] sm:%s10]
          %28 = vst [vmem:[%s18 + $0x40] sm:%s10] %v27
          %v29 = vld [vmem:[%s17 + $0x28] sm:%s10]
          %30 = vst [vmem:[%s18 + $0x50] sm:%s10] %v29
          %v31 = vld [vmem:[%s17 + $0x30] sm:%s10]
          %32 = vst [vmem:[%s18 + $0x60] sm:%s10] %v31
          %v33 = vld [vmem:[%s17 + $0x38] sm:%s10]
          %34 = vst [vmem:[%s18 + $0x70] sm:%s10] %v33
        $region18: #{reverse.1} parent=12 // loop_footer
          %s16 = sadd.s32 1, %s12
        $region19: #{reverse.1} parent=12 // loop_footer_branch
          %11 = sbr.rel target = $region15
        $region20: #{reverse.1} parent=12 // loop_exit
          _
      $region13: #{reverse.1} parent=4 // pred_fallthru
        _
    $region5: #{reverse.1} parent=1 // pred_fallthru
      _
    %63 = vnop
    %s64 = scalar_lea.vmem [#allocation0], 7
    %v65 = vld [vmem:[%s64] ss:$-1 sm:$0xff]
    %v66 = vrot.slane %v65, 1
    %67 = vst [vmem:[#allocation1] sm:$0xff] %v66
    %s68 = scalar_lea.vmem [#allocation0], 8
    %s69 = scalar_lea.vmem %s68, 7 [#allocation0]
    %v70 = vld [vmem:[%s69] ss:$-1 sm:$0xff]
    %v71 = vrot.slane %v70, 1
    %v72 = vlaneseq
    %v73 = vshrl.u32 %v72, 7
    %vm74 = vcmp.lt.s32.totalorder %v73, 7
    %75 = vst.msk [vmem:[#allocation1] sm:$0xff] %vm74, %v71
    %s76 = scalar_lea.vmem [#allocation1], 8
    %s77 = scalar_lea.vmem [#allocation0], 16
    %s78 = scalar_lea.vmem %s77, 7 [#allocation0]
    %v79 = vld [vmem:[%s78] ss:$-1 sm:$0xff]
    %v80 = vrot.slane %v79, 1
    %81 = vst [vmem:[%s76] sm:$0xff] %v80
    %s82 = scalar_lea.vmem %s77, 8 [#allocation0]
    %s83 = scalar_lea.vmem %s82, 7 [#allocation0]
    %v84 = vld [vmem:[%s83] ss:$-1 sm:$0xff]
    %v85 = vrot.slane %v84, 1
    %v86 = vlaneseq
    %v87 = vshrl.u32 %v86, 7
    %vm88 = vcmp.lt.s32.totalorder %v87, 7
    %89 = vst.msk [vmem:[%s76] sm:$0xff] %vm88, %v85
    %s90 = scalar_lea.vmem [#allocation1], 16
    %s91 = scalar_lea.vmem [#allocation0], 32
    %s92 = scalar_lea.vmem %s91, 7 [#allocation0]
    %v93 = vld [vmem:[%s92] ss:$-1 sm:$0xff]
    %v94 = vrot.slane %v93, 1
    %95 = vst [vmem:[%s90] sm:$0xff] %v94
    %s96 = scalar_lea.vmem %s91, 8 [#allocation0]
    %s97 = scalar_lea.vmem %s96, 7 [#allocation0]
    %v98 = vld [vmem:[%s97] ss:$-1 sm:$0xff]
    %v99 = vrot.slane %v98, 1
    %v100 = vlaneseq
    %v101 = vshrl.u32 %v100, 7
    %vm102 = vcmp.lt.s32.totalorder %v101, 7
    %103 = vst.msk [vmem:[%s90] sm:$0xff] %vm102, %v99
    %s104 = scalar_lea.vmem [#allocation1], 24
    %s105 = scalar_lea.vmem [#allocation0], 48
    %s106 = scalar_lea.vmem %s105, 7 [#allocation0]
    %v107 = vld [vmem:[%s106] ss:$-1 sm:$0xff]
    %v108 = vrot.slane %v107, 1
    %109 = vst [vmem:[%s104] sm:$0xff] %v108
    %s110 = scalar_lea.vmem %s105, 8 [#allocation0]
    %s111 = scalar_lea.vmem %s110, 7 [#allocation0]
    %v112 = vld [vmem:[%s111] ss:$-1 sm:$0xff]
    %v113 = vrot.slane %v112, 1
    %v114 = vlaneseq
    %v115 = vshrl.u32 %v114, 7
    %vm116 = vcmp.lt.s32.totalorder %v115, 7
    %117 = vst.msk [vmem:[%s104] sm:$0xff] %vm116, %v113
    %s118 = scalar_lea.vmem [#allocation1], 32
    %s119 = scalar_lea.vmem [#allocation0], 64
    %s120 = scalar_lea.vmem %s119, 7 [#allocation0]
    %v121 = vld [vmem:[%s120] ss:$-1 sm:$0xff]
    %v122 = vrot.slane %v121, 1
    %123 = vst [vmem:[%s118] sm:$0xff] %v122
    %s124 = scalar_lea.vmem %s119, 8 [#allocation0]
    %s125 = scalar_lea.vmem %s124, 7 [#allocation0]
    %v126 = vld [vmem:[%s125] ss:$-1 sm:$0xff]
    %v127 = vrot.slane %v126, 1
    %v128 = vlaneseq
    %v129 = vshrl.u32 %v128, 7
    %vm130 = vcmp.lt.s32.totalorder %v129, 7
    %131 = vst.msk [vmem:[%s118] sm:$0xff] %vm130, %v127
    %s132 = scalar_lea.vmem [#allocation1], 40
    %s133 = scalar_lea.vmem [#allocation0], 80
    %s134 = scalar_lea.vmem %s133, 7 [#allocation0]
    %v135 = vld [vmem:[%s134] ss:$-1 sm:$0xff]
    %v136 = vrot.slane %v135, 1
    %137 = vst [vmem:[%s132] sm:$0xff] %v136
    %s138 = scalar_lea.vmem %s133, 8 [#allocation0]
    %s139 = scalar_lea.vmem %s138, 7 [#allocation0]
    %v140 = vld [vmem:[%s139] ss:$-1 sm:$0xff]
    %v141 = vrot.slane %v140, 1
    %v142 = vlaneseq
    %v143 = vshrl.u32 %v142, 7
    %vm144 = vcmp.lt.s32.totalorder %v143, 7
    %145 = vst.msk [vmem:[%s132] sm:$0xff] %vm144, %v141
    %s146 = scalar_lea.vmem [#allocation1], 48
    %s147 = scalar_lea.vmem [#allocation0], 96
    %s148 = scalar_lea.vmem %s147, 7 [#allocation0]
    %v149 = vld [vmem:[%s148] ss:$-1 sm:$0xff]
    %v150 = vrot.slane %v149, 1
    %151 = vst [vmem:[%s146] sm:$0xff] %v150
    %s152 = scalar_lea.vmem %s147, 8 [#allocation0]
    %s153 = scalar_lea.vmem %s152, 7 [#allocation0]
    %v154 = vld [vmem:[%s153] ss:$-1 sm:$0xff]
    %v155 = vrot.slane %v154, 1
    %v156 = vlaneseq
    %v157 = vshrl.u32 %v156, 7
    %vm158 = vcmp.lt.s32.totalorder %v157, 7
    %159 = vst.msk [vmem:[%s146] sm:$0xff] %vm158, %v155
    %s160 = scalar_lea.vmem [#allocation1], 56
    %s161 = scalar_lea.vmem [#allocation0], 112
    %s162 = scalar_lea.vmem %s161, 7 [#allocation0]
    %v163 = vld [vmem:[%s162] ss:$-1 sm:$0xff]
    %v164 = vrot.slane %v163, 1
    %165 = vst [vmem:[%s160] sm:$0xff] %v164
    %s166 = scalar_lea.vmem %s161, 8 [#allocation0]
    %s167 = scalar_lea.vmem %s166, 7 [#allocation0]
    %v168 = vld [vmem:[%s167] ss:$-1 sm:$0xff]
    %v169 = vrot.slane %v168, 1
    %v170 = vlaneseq
    %v171 = vshrl.u32 %v170, 7
    %vm172 = vcmp.lt.s32.totalorder %v171, 7
    %173 = vst.msk [vmem:[%s160] sm:$0xff] %vm172, %v169
    // Predicated region
    $region36: #{reverse.1} parent=1 // pred_check
      _
    $region37: #{reverse.1} parent=1 // pred_check_branch
      %175 = sbr.rel (0) target = $region39
    $region38: #{reverse.1} parent=1 // pred_region
      // Predicated region
      $region40: #{reverse.1} parent=38 // pred_check
        _
      $region41: #{reverse.1} parent=38 // pred_check_branch
        %177 = sbr.rel (0) target = $region43
      $region42: #{reverse.1} parent=38 // pred_region
        // Predicated region
        $region55: #{reverse.1} parent=42 // pred_check
          _
        $region56: #{reverse.1} parent=42 // pred_check_branch
          %207 = sbr.rel (0) target = $region58
        $region57: #{reverse.1} parent=42 // pred_region
          loop: start=0, step=1, limit=1
          $region59: #{reverse.1} parent=57 // loop_pre_header
            _
          $region60: #{reverse.1} parent=57 // loop_header
            %s209 = sphi 0, %s213
            %p210 = scmp.ge.s32.totalorder %s209, 1
            %s214 = sphi [#allocation1], [#allocation1]
            %s215 = sphi %s1, %s1
          $region61: #{reverse.1} parent=57 // loop_header_branch
            %212 = sbr.rel (%p210) target = $region65
          $region62: #{reverse.1} parent=57 // loop_body
            %v216 = vld [vmem:[%s214] sm:$0xff]
            %217 = vst [vmem:[%s215] sm:$0xff] %v216
            %v218 = vld [vmem:[%s214 + $0x8] sm:$0xff]
            %219 = vst [vmem:[%s215 + $0x8] sm:$0xff] %v218
            %v220 = vld [vmem:[%s214 + $0x10] sm:$0xff]
            %221 = vst [vmem:[%s215 + $0x10] sm:$0xff] %v220
            %v222 = vld [vmem:[%s214 + $0x18] sm:$0xff]
            %223 = vst [vmem:[%s215 + $0x18] sm:$0xff] %v222
            %v224 = vld [vmem:[%s214 + $0x20] sm:$0xff]
            %225 = vst [vmem:[%s215 + $0x20] sm:$0xff] %v224
            %v226 = vld [vmem:[%s214 + $0x28] sm:$0xff]
            %227 = vst [vmem:[%s215 + $0x28] sm:$0xff] %v226
            %v228 = vld [vmem:[%s214 + $0x30] sm:$0xff]
            %229 = vst [vmem:[%s215 + $0x30] sm:$0xff] %v228
            %v230 = vld [vmem:[%s214 + $0x38] sm:$0xff]
            %231 = vst [vmem:[%s215 + $0x38] sm:$0xff] %v230
          $region63: #{reverse.1} parent=57 // loop_footer
            %s213 = sadd.s32 1, %s209
          $region64: #{reverse.1} parent=57 // loop_footer_branch
            %208 = sbr.rel target = $region60
          $region65: #{reverse.1} parent=57 // loop_exit
            _
        $region58: #{reverse.1} parent=42 // pred_fallthru
          _
        // Predicated region
        $region66: #{reverse.1} parent=42 // pred_check
          _
        $region67: #{reverse.1} parent=42 // pred_check_branch
          %233 = sbr.rel target = $region69
        $region68: #{reverse.1} parent=42 // pred_region
          _
        $region69: #{reverse.1} parent=42 // pred_fallthru
          _
      $region43: #{reverse.1} parent=38 // pred_fallthru
        _
      // Predicated region
      $region44: #{reverse.1} parent=38 // pred_check
        _
      $region45: #{reverse.1} parent=38 // pred_check_branch
        %179 = sbr.rel target = $region47
      $region46: #{reverse.1} parent=38 // pred_region
        %s181 = ssub.s32 256, 1
        loop: start=0, step=1, limit=1
        $region48: #{reverse.1} parent=46 // loop_pre_header
          _
        $region49: #{reverse.1} parent=46 // loop_header
          %s183 = sphi 0, %s187
          %p184 = scmp.ge.s32.totalorder %s183, 1
          %s188 = sphi [#allocation1], [#allocation1]
          %s189 = sphi %s1, %s1
        $region50: #{reverse.1} parent=46 // loop_header_branch
          %186 = sbr.rel (%p184) target = $region54
        $region51: #{reverse.1} parent=46 // loop_body
          %v190 = vld [vmem:[%s188] sm:%s181]
          %191 = vst [vmem:[%s189] sm:%s181] %v190
          %v192 = vld [vmem:[%s188 + $0x8] sm:%s181]
          %193 = vst [vmem:[%s189 + $0x8] sm:%s181] %v192
          %v194 = vld [vmem:[%s188 + $0x10] sm:%s181]
          %195 = vst [vmem:[%s189 + $0x10] sm:%s181] %v194
          %v196 = vld [vmem:[%s188 + $0x18] sm:%s181]
          %197 = vst [vmem:[%s189 + $0x18] sm:%s181] %v196
          %v198 = vld [vmem:[%s188 + $0x20] sm:%s181]
          %199 = vst [vmem:[%s189 + $0x20] sm:%s181] %v198
          %v200 = vld [vmem:[%s188 + $0x28] sm:%s181]
          %201 = vst [vmem:[%s189 + $0x28] sm:%s181] %v200
          %v202 = vld [vmem:[%s188 + $0x30] sm:%s181]
          %203 = vst [vmem:[%s189 + $0x30] sm:%s181] %v202
          %v204 = vld [vmem:[%s188 + $0x38] sm:%s181]
          %205 = vst [vmem:[%s189 + $0x38] sm:%s181] %v204
        $region52: #{reverse.1} parent=46 // loop_footer
          %s187 = sadd.s32 1, %s183
        $region53: #{reverse.1} parent=46 // loop_footer_branch
          %182 = sbr.rel target = $region49
        $region54: #{reverse.1} parent=46 // loop_exit
          _
      $region47: #{reverse.1} parent=38 // pred_fallthru
        _
    $region39: #{reverse.1} parent=1 // pred_fallthru
      _
    %234 = vnop

// kernel: fourier_layer.1
$region0: #{fourier_layer.1}
  #allocation0 [shape = 'u32[]', space=smem, size = 0x4, offset = 0x4, fixed_abs, tag = 'smem constant byte address 0x4 - core index']
  #allocation1 [shape = 'u32[72,128]{1,0:T(1,128)}', space=vmem, size = 0x9000, scoped, tag = 'internal scratch']
  %s0 = inlined_call_operand.vmem [shape: f32[2,2,8,512], index: 0, kind: input, shape index: {}]
  %s1 = inlined_call_operand.vmem [shape: f32[2,8,8,512], index: 1, kind: input, shape index: {}]
  %s2 = inlined_call_operand.vmem [shape: f32[2,2,8,512], index: 2, kind: output, shape index: {}]
  %s3 = sld [smem:[#allocation0]]
  $region87: #{fourier_layer.1} parent=0
    _
  %s5 = ssub.s32 1, %s3
  %s6 = scalar_select 0, %s5, %s3
  $region1: #{fourier_layer.1} parent=0
    #allocation2 [shape = 'u8[65536]{0}', space=vmem, size = 0x10000, scoped, tag = 'input window, operand 0']
    #allocation3 [shape = 'u8[65536]{0}', space=vmem, size = 0x10000, scoped, tag = 'output window, operand 0']
    loop: start=0, step=1, limit=4
    $region2: #{fourier_layer.1} parent=1 // loop_pre_header
      _
    $region3: #{fourier_layer.1} parent=1 // loop_header
      %s8 = sphi 0, %s12
      %p9 = scmp.ge.s32.totalorder %s8, 4
      %s15 = sphi 0, %s41
      %s16 = sphi 0, %s37
      %s17 = sphi 0, %s33
      %s18 = sphi 0, %s29
      %s19 = sphi 0, %s15
      %s20 = sphi 0, %s16
      %s21 = sphi 0, %s17
      %s22 = sphi 0, %s18
      %s23 = sphi 0, %s19
      %s24 = sphi 0, %s20
      %s25 = sphi 0, %s21
      %s26 = sphi 0, %s22
      %s48 = sphi 0, %s50
      %s51 = sphi 0, %s48
      %s52 = sphi 0, %s51
      %s68 = sphi 0, %s52
      %s78 = sphi 0, %s80
      %s81 = sphi 0, %s78
      %s82 = sphi 0, %s81
      %s98 = sphi 0, %s82
      %s108 = sphi 0, %s110
      %s111 = sphi 0, %s108
      %s112 = sphi 0, %s111
      %s128 = sphi 0, %s112
    $region4: #{fourier_layer.1} parent=1 // loop_header_branch
      %11 = sbr.rel (%p9) target = $region8
    $region5: #{fourier_layer.1} parent=1 // loop_body
      %s13 = ssub.s32 %s8, 1
      %s14 = ssub.s32 %s8, 2
      %s27 = sadd.s32 1, %s18
      %p28 = scmp.ge.s32.totalorder %s27, 1
      %s29 = scalar_select %p28, 0, %s27
      %s30 = sadd.s32 1, %s17
      %s31 = scalar_select %p28, %s30, %s17
      %p32 = scmp.ge.s32.totalorder %s31, 1
      %s33 = scalar_select %p32, 0, %s31
      %s34 = sadd.s32 1, %s16
      %s35 = scalar_select %p32, %s34, %s16
      %p36 = scmp.ge.s32.totalorder %s35, 1
      %s37 = scalar_select %p36, 0, %s35
      %s38 = sadd.s32 1, %s15
      %s39 = scalar_select %p36, %s38, %s15
      %p40 = scmp.ge.s32.totalorder %s39, 2
      %s41 = scalar_select %p40, 0, %s39
      %s42 = ssub.s32 %s15, %s41
      %s43 = ssub.s32 %s18, %s29
      %s44 = sor.u32 %s42, %s43
      %s45 = ssub.s32 %s16, %s37
      %s46 = sor.u32 %s44, %s45
      %p47 = scmp.eq.s32.totalorder %s46, 0
      %s49 = sadd.s32 %s48, 1
      %s50 = scalar_select %p47, %s48, %s49
      %p53 = pneg %p47
      %p54 = scmp.eq.s32.totalorder %s8, 1
      %p55 = por %p53, %p54
      %p56 = scmp.ne.s32.totalorder %s48, %s51
      %p57 = scmp.eq.s32.totalorder %s8, 0
      %p58 = por %p56, %p57
      %p59 = scmp.ne.s32.totalorder %s48, %s51
      %p60 = scmp.eq.s32.totalorder %s13, 1
      %p61 = por %p59, %p60
      %p62 = scmp.ne.s32.totalorder %s51, %s52
      %p63 = scmp.eq.s32.totalorder %s13, 0
      %p64 = por %p62, %p63
      %p65 = scmp.ne.s32.totalorder %s51, %s52
      %p66 = scmp.eq.s32.totalorder %s14, 1
      %p67 = por %p65, %p66
      %p69 = scmp.ne.s32.totalorder %s52, %s68
      %p70 = scmp.eq.s32.totalorder %s14, 0
      %p71 = por %p69, %p70
      %s72 = ssub.s32 %s18, %s29
      %s73 = ssub.s32 %s17, %s33
      %s74 = sor.u32 %s72, %s73
      %s75 = ssub.s32 %s16, %s37
      %s76 = sor.u32 %s74, %s75
      %p77 = scmp.eq.s32.totalorder %s76, 0
      %s79 = sadd.s32 %s78, 1
      %s80 = scalar_select %p77, %s78, %s79
      %p83 = pneg %p77
      %p84 = scmp.eq.s32.totalorder %s8, 1
      %p85 = por %p83, %p84
      %p86 = scmp.ne.s32.totalorder %s78, %s81
      %p87 = scmp.eq.s32.totalorder %s8, 0
      %p88 = por %p86, %p87
      %p89 = scmp.ne.s32.totalorder %s78, %s81
      %p90 = scmp.eq.s32.totalorder %s13, 1
      %p91 = por %p89, %p90
      %p92 = scmp.ne.s32.totalorder %s81, %s82
      %p93 = scmp.eq.s32.totalorder %s13, 0
      %p94 = por %p92, %p93
      %p95 = scmp.ne.s32.totalorder %s81, %s82
      %p96 = scmp.eq.s32.totalorder %s14, 1
      %p97 = por %p95, %p96
      %p99 = scmp.ne.s32.totalorder %s82, %s98
      %p100 = scmp.eq.s32.totalorder %s14, 0
      %p101 = por %p99, %p100
      %s102 = ssub.s32 %s15, %s41
      %s103 = ssub.s32 %s17, %s33
      %s104 = sor.u32 %s102, %s103
      %s105 = ssub.s32 %s16, %s37
      %s106 = sor.u32 %s104, %s105
      %p107 = scmp.eq.s32.totalorder %s106, 0
      %s109 = sadd.s32 %s108, 1
      %s110 = scalar_select %p107, %s108, %s109
      %p113 = pneg %p107
      %p114 = scmp.eq.s32.totalorder %s8, 1
      %p115 = por %p113, %p114
      %p116 = scmp.ne.s32.totalorder %s108, %s111
      %p117 = scmp.eq.s32.totalorder %s8, 0
      %p118 = por %p116, %p117
      %p119 = scmp.ne.s32.totalorder %s108, %s111
      %p120 = scmp.eq.s32.totalorder %s13, 1
      %p121 = por %p119, %p120
      %p122 = scmp.ne.s32.totalorder %s111, %s112
      %p123 = scmp.eq.s32.totalorder %s13, 0
      %p124 = por %p122, %p123
      %p125 = scmp.ne.s32.totalorder %s111, %s112
      %p126 = scmp.eq.s32.totalorder %s14, 1
      %p127 = por %p125, %p126
      %p129 = scmp.ne.s32.totalorder %s112, %s128
      %p130 = scmp.eq.s32.totalorder %s14, 0
      %p131 = por %p129, %p130
      %p132 = scmp.le.s32.totalorder 1, %s8
      %p133 = scmp.lt.s32.totalorder %s8, 3
      %p134 = pnand %p132, %p133
      %p135 = pneg %p134
      // Predicated region
      $region9: #{fourier_layer.1} parent=5 // pred_check
        _
      $region10: #{fourier_layer.1} parent=5 // pred_check_branch
        %137 = sbr.rel (%p134) target = $region12
      $region11: #{fourier_layer.1} parent=5 // pred_region
        %s138 = ssub.s32 %s8, 1
        // Predicated region
        $region13: #{fourier_layer.1} parent=11 // pred_check
          %p139 = pneg %p94
        $region14: #{fourier_layer.1} parent=11 // pred_check_branch
          %141 = sbr.rel (%p139) target = $region16
        $region15: #{fourier_layer.1} parent=11 // pred_region
          %s142 = smul.u32 8, %s22
          %s143 = smul.u32 4, %s20
          %p144 = scmp.lt.s32.totalorder %s142, 7
          %s145 = scalar_select %p144, %s142, 7
          %p146 = scmp.lt.s32.totalorder %s21, 0
          %s147 = scalar_select %p146, %s21, 0
          %p148 = scmp.lt.s32.totalorder %s143, 3
          %s149 = scalar_select %p148, %s143, 3
          %s150 = smul.addr %s147, 4
          %s151 = sadd.s32 %s149, %s150
          %s152 = smul.addr %s145, 4
          %s153 = sadd.s32 %s151, %s152
          %s154 = smul.addr %s153, 8
          %s155 = scalar_lea.vmem %s1, %s154
          %s156 = smul.u32 8, %s22
          %s157 = smul.u32 4, %s20
        $region16: #{fourier_layer.1} parent=11 // pred_fallthru
          _
      $region12: #{fourier_layer.1} parent=5 // pred_fallthru
        _
      %p158 = scmp.lt.s32.totalorder %s8, 2
      // Predicated region
      $region17: #{fourier_layer.1} parent=5 // pred_check
        %p159 = pneg %p158
      $region18: #{fourier_layer.1} parent=5 // pred_check_branch
        %161 = sbr.rel (%p159) target = $region20
      $region19: #{fourier_layer.1} parent=5 // pred_region
        // Predicated region
        $region21: #{fourier_layer.1} parent=19 // pred_check
          %p162 = pneg %p58
        $region22: #{fourier_layer.1} parent=19 // pred_check_branch
          %164 = sbr.rel (%p162) target = $region24
        $region23: #{fourier_layer.1} parent=19 // pred_region
          %s165 = sand.u32 %s48, 1
          %s166 = sand.u32 %s48, 1
          %s167 = smul.addr %s166, 64
          %s168 = scalar_lea.vmem [#allocation2], %s167
          %s169 = smul.u32 4, %s16
          %s170 = smul.addr %s18, 4
          %s171 = sadd.s32 %s169, %s170
          %s172 = smul.addr %s15, 4
          %s173 = sadd.s32 %s171, %s172
          %s174 = smul.addr %s173, 8
          %s175 = scalar_lea.vmem %s0, %s174
          // Predicated region
          $region25: #{fourier_layer.1} parent=23 // pred_check
            _
          $region26: #{fourier_layer.1} parent=23 // pred_check_branch
            %177 = sbr.rel (0) target = $region28
          $region27: #{fourier_layer.1} parent=23 // pred_region
            // Predicated region
            $region29: #{fourier_layer.1} parent=27 // pred_check
              _
            $region30: #{fourier_layer.1} parent=27 // pred_check_branch
              %179 = sbr.rel (0) target = $region32
            $region31: #{fourier_layer.1} parent=27 // pred_region
              loop: start=0, step=1, limit=1
              $region33: #{fourier_layer.1} parent=31 // loop_pre_header
                _
              $region34: #{fourier_layer.1} parent=31 // loop_header
                %s181 = sphi 0, %s185
                %p182 = scmp.ge.s32.totalorder %s181, 1
                %s186 = sphi %s175, %s175
                %s187 = sphi %s168, %s168
              $region35: #{fourier_layer.1} parent=31 // loop_header_branch
                %184 = sbr.rel (%p182) target = $region39
              $region36: #{fourier_layer.1} parent=31 // loop_body
                %v188 = vld [vmem:[%s186] sm:$0xff]
                %189 = vst [vmem:[%s187] sm:$0xff] %v188
                %v190 = vld [vmem:[%s186 + $0x8] sm:$0xff]
                %191 = vst [vmem:[%s187 + $0x8] sm:$0xff] %v190
                %v192 = vld [vmem:[%s186 + $0x10] sm:$0xff]
                %193 = vst [vmem:[%s187 + $0x10] sm:$0xff] %v192
                %v194 = vld [vmem:[%s186 + $0x18] sm:$0xff]
                %195 = vst [vmem:[%s187 + $0x18] sm:$0xff] %v194
                %v196 = vld [vmem:[%s186 + $0x40] sm:$0xff]
                %197 = vst [vmem:[%s187 + $0x20] sm:$0xff] %v196
                %v198 = vld [vmem:[%s186 + $0x48] sm:$0xff]
                %199 = vst [vmem:[%s187 + $0x28] sm:$0xff] %v198
                %v200 = vld [vmem:[%s186 + $0x50] sm:$0xff]
                %201 = vst [vmem:[%s187 + $0x30] sm:$0xff] %v200
                %v202 = vld [vmem:[%s186 + $0x58] sm:$0xff]
                %203 = vst [vmem:[%s187 + $0x38] sm:$0xff] %v202
              $region37: #{fourier_layer.1} parent=31 // loop_footer
                %s185 = sadd.s32 1, %s181
              $region38: #{fourier_layer.1} parent=31 // loop_footer_branch
                %180 = sbr.rel target = $region34
              $region39: #{fourier_layer.1} parent=31 // loop_exit
                _
            $region32: #{fourier_layer.1} parent=27 // pred_fallthru
              _
            // Predicated region
            $region40: #{fourier_layer.1} parent=27 // pred_check
              _
            $region41: #{fourier_layer.1} parent=27 // pred_check_branch
              %205 = sbr.rel target = $region43
            $region42: #{fourier_layer.1} parent=27 // pred_region
              _
            $region43: #{fourier_layer.1} parent=27 // pred_fallthru
              _
          $region28: #{fourier_layer.1} parent=23 // pred_fallthru
            _
          %206 = vnop
        $region24: #{fourier_layer.1} parent=19 // pred_fallthru
          _
      $region20: #{fourier_layer.1} parent=5 // pred_fallthru
        _
      %p207 = scmp.le.s32.totalorder 1, %s8
      %p208 = scmp.lt.s32.totalorder %s8, 3
      %p209 = pnand %p207, %p208
      %p210 = pneg %p209
      // Predicated region
      $region44: #{fourier_layer.1} parent=5 // pred_check
        _
      $region45: #{fourier_layer.1} parent=5 // pred_check_branch
        %212 = sbr.rel (%p209) target = $region47
      $region46: #{fourier_layer.1} parent=5 // pred_region
        %s213 = ssub.s32 %s8, 1
        %s214 = sand.u32 %s51, 1
        %s215 = sand.u32 %s51, 1
        %s216 = smul.addr %s215, 64
        %s217 = scalar_lea.vmem [#allocation2], %s216
        // Predicated region
        $region48: #{fourier_layer.1} parent=46 // pred_check
          %p218 = pneg %p64
        $region49: #{fourier_layer.1} parent=46 // pred_check_branch
          %220 = sbr.rel (%p218) target = $region51
        $region50: #{fourier_layer.1} parent=46 // pred_region
          _
        $region51: #{fourier_layer.1} parent=46 // pred_fallthru
          _
        %s221 = sand.u32 %s51, 1
        %s222 = sand.u32 %s51, 1
        %s223 = smul.addr %s222, 64
        %s224 = scalar_lea.vmem [#allocation2], %s223
        %p225 = pneg %p64
        %p226 = pneg %p61
        %s227 = smul.u32 8, %s22
        %s228 = smul.u32 4, %s20
        %p229 = scmp.lt.s32.totalorder %s227, 7
        %s230 = scalar_select %p229, %s227, 7
        %p231 = scmp.lt.s32.totalorder %s21, 0
        %s232 = scalar_select %p231, %s21, 0
        %p233 = scmp.lt.s32.totalorder %s228, 3
        %s234 = scalar_select %p233, %s228, 3
        %s235 = smul.addr %s232, 4
        %s236 = sadd.s32 %s234, %s235
        %s237 = smul.addr %s230, 4
        %s238 = sadd.s32 %s236, %s237
        %s239 = smul.addr %s238, 8
        %s240 = scalar_lea.vmem %s1, %s239
        %p241 = pneg %p94
        %p242 = pneg %p91
        %p243 = pneg %p124
        %p244 = pneg %p121
        %s245 = sand.u32 %s111, 1
        %s246 = sand.u32 %s111, 1
        %s247 = smul.addr %s246, 64
        %s248 = scalar_lea.vmem [#allocation3], %s247
        %s249 = smul.u32 4, %s20
        %s250 = smul.u32 8, %s22
        %s251 = smul.u32 4, %s20
        %p252 = scmp.lt.s32.totalorder %s250, 7
        %s253 = scalar_select %p252, %s250, 7
        %p254 = scmp.lt.s32.totalorder %s21, 0
        %s255 = scalar_select %p254, %s21, 0
        %p256 = scmp.lt.s32.totalorder %s251, 3
        %s257 = scalar_select %p256, %s251, 3
        %s258 = smul.addr %s255, 4
        %s259 = sadd.s32 %s257, %s258
        %s260 = smul.addr %s253, 4
        %s261 = sadd.s32 %s259, %s260
        %s262 = smul.addr %s261, 8
        %s263 = scalar_lea.vmem %s1, %s262
        %s264 = smul.u32 8, %s22
        %s265 = smul.u32 4, %s20
        %s266 = smul.u32 4, %s20
        %p267 = scmp.eq.s32.totalorder %s22, 0
        // Predicated region
        $region52: #{fourier_layer.1} parent=46 // pred_check
          %p268 = pneg %p267
        $region53: #{fourier_layer.1} parent=46 // pred_check_branch
          %270 = sbr.rel (%p268) target = $region55
        $region54: #{fourier_layer.1} parent=46 // pred_region
          %271 = vst [vmem:[%s248] sm:$0xff] 0.0
          %272 = vst [vmem:[%s248 + $0x8] sm:$0xff] 0.0
          %273 = vst [vmem:[%s248 + $0x10] sm:$0xff] 0.0
          %274 = vst [vmem:[%s248 + $0x18] sm:$0xff] 0.0
          %275 = vst [vmem:[%s248 + $0x20] sm:$0xff] 0.0
          %276 = vst [vmem:[%s248 + $0x28] sm:$0xff] 0.0
          %277 = vst [vmem:[%s248 + $0x30] sm:$0xff] 0.0
          %278 = vst [vmem:[%s248 + $0x38] sm:$0xff] 0.0
        $region55: #{fourier_layer.1} parent=46 // pred_fallthru
          _
        %v279 = vld [vmem:[%s248] sm:$0xff]
        %v280 = vld [vmem:[%s248 + $0x8] sm:$0xff]
        %v281 = vld [vmem:[%s248 + $0x10] sm:$0xff]
        %v282 = vld [vmem:[%s248 + $0x18] sm:$0xff]
        %s283 = scalar_lea.vmem %s248, 32 [#allocation3]
        %v284 = vld [vmem:[%s283] sm:$0xff]
        %v285 = vld [vmem:[%s283 + $0x8] sm:$0xff]
        %v286 = vld [vmem:[%s283 + $0x10] sm:$0xff]
        %v287 = vld [vmem:[%s283 + $0x18] sm:$0xff]
        %v288 = vld [vmem:[%s217] ss:$8 sm:$0xf]
        %s289 = scalar_lea.vmem %s217, 32 [#allocation2]
        %v290 = vld [vmem:[%s289] ss:$8 sm:$0xf]
        %v291 = vld [vmem:[%s263] sm:$0xff]
        %v292 = vld [vmem:[%s263 + $0x8] sm:$0xff]
        %v293 = vld [vmem:[%s263 + $0x10] sm:$0xff]
        %v294 = vld [vmem:[%s263 + $0x18] sm:$0xff]
        %s295 = scalar_lea.vmem %s263, 256
        %v296 = vld [vmem:[%s295] sm:$0xff]
        %v297 = vld [vmem:[%s295 + $0x8] sm:$0xff]
        %v298 = vld [vmem:[%s295 + $0x10] sm:$0xff]
        %v299 = vld [vmem:[%s295 + $0x18] sm:$0xff]
        %v301 = vperm.slane %v288, 0
        %v302 = vperm.slane %v288, 1
        %v303 = vperm.slane %v288, 2
        %v304 = vperm.slane %v288, 3
        %v309 = vmul.f32 %v301, %v291
        %v310 = vmul.f32 %v302, %v292
        %v311 = vmul.f32 %v303, %v293
        %v312 = vmul.f32 %v304, %v294
        %v313 = vadd.f32 %v279, %v309
        %v314 = vadd.f32 %v280, %v310
        %v315 = vadd.f32 %v281, %v311
        %v316 = vadd.f32 %v282, %v312
        %v318 = vperm.slane %v290, 0
        %v319 = vperm.slane %v290, 1
        %v320 = vperm.slane %v290, 2
        %v321 = vperm.slane %v290, 3
        %v326 = vmul.f32 %v318, %v296
        %v327 = vmul.f32 %v319, %v297
        %v328 = vmul.f32 %v320, %v298
        %v329 = vmul.f32 %v321, %v299
        %v330 = vsub.f32 %v313, %v326
        %v331 = vsub.f32 %v314, %v327
        %v332 = vsub.f32 %v315, %v328
        %v333 = vsub.f32 %v316, %v329
        %v334 = vmul.f32 %v301, %v296
        %v335 = vmul.f32 %v302, %v297
        %v336 = vmul.f32 %v303, %v298
        %v337 = vmul.f32 %v304, %v299
        %v338 = vadd.f32 %v284, %v334
        %v339 = vadd.f32 %v285, %v335
        %v340 = vadd.f32 %v286, %v336
        %v341 = vadd.f32 %v287, %v337
        %v342 = vmul.f32 %v318, %v291
        %v343 = vmul.f32 %v319, %v292
        %v344 = vmul.f32 %v320, %v293
        %v345 = vmul.f32 %v321, %v294
        %v346 = vadd.f32 %v338, %v342
        %v347 = vadd.f32 %v339, %v343
        %v348 = vadd.f32 %v340, %v344
        %v349 = vadd.f32 %v341, %v345
        %s350 = scalar_lea.vmem %s217, 1 [#allocation2]
        %v351 = vld [vmem:[%s350] ss:$8 sm:$0xf]
        %s352 = scalar_lea.vmem %s289, 1 [#allocation2]
        %v353 = vld [vmem:[%s352] ss:$8 sm:$0xf]
        %s354 = scalar_lea.vmem %s263, 32
        %v355 = vld [vmem:[%s354] sm:$0xff]
        %v356 = vld [vmem:[%s354 + $0x8] sm:$0xff]
        %v357 = vld [vmem:[%s354 + $0x10] sm:$0xff]
        %v358 = vld [vmem:[%s354 + $0x18] sm:$0xff]
        %s359 = scalar_lea.vmem %s263, 288
        %v360 = vld [vmem:[%s359] sm:$0xff]
        %v361 = vld [vmem:[%s359 + $0x8] sm:$0xff]
        %v362 = vld [vmem:[%s359 + $0x10] sm:$0xff]
        %v363 = vld [vmem:[%s359 + $0x18] sm:$0xff]
        %v365 = vperm.slane %v351, 0
        %v366 = vperm.slane %v351, 1
        %v367 = vperm.slane %v351, 2
        %v368 = vperm.slane %v351, 3
        %v373 = vmul.f32 %v365, %v355
        %v374 = vmul.f32 %v366, %v356
        %v375 = vmul.f32 %v367, %v357
        %v376 = vmul.f32 %v368, %v358
        %v377 = vadd.f32 %v330, %v373
        %v378 = vadd.f32 %v331, %v374
        %v379 = vadd.f32 %v332, %v375
        %v380 = vadd.f32 %v333, %v376
        %v382 = vperm.slane %v353, 0
        %v383 = vperm.slane %v353, 1
        %v384 = vperm.slane %v353, 2
        %v385 = vperm.slane %v353, 3
        %v390 = vmul.f32 %v382, %v360
        %v391 = vmul.f32 %v383, %v361
        %v392 = vmul.f32 %v384, %v362
        %v393 = vmul.f32 %v385, %v363
        %v394 = vsub.f32 %v377, %v390
        %v395 = vsub.f32 %v378, %v391
        %v396 = vsub.f32 %v379, %v392
        %v397 = vsub.f32 %v380, %v393
        %v398 = vmul.f32 %v365, %v360
        %v399 = vmul.f32 %v366, %v361
        %v400 = vmul.f32 %v367, %v362
        %v401 = vmul.f32 %v368, %v363
        %v402 = vadd.f32 %v346, %v398
        %v403 = vadd.f32 %v347, %v399
        %v404 = vadd.f32 %v348, %v400
        %v405 = vadd.f32 %v349, %v401
        %v406 = vmul.f32 %v382, %v355
        %v407 = vmul.f32 %v383, %v356
        %v408 = vmul.f32 %v384, %v357
        %v409 = vmul.f32 %v385, %v358
        %v410 = vadd.f32 %v402, %v406
        %v411 = vadd.f32 %v403, %v407
        %v412 = vadd.f32 %v404, %v408
        %v413 = vadd.f32 %v405, %v409
        %s414 = scalar_lea.vmem %s217, 2 [#allocation2]
        %v415 = vld [vmem:[%s414] ss:$8 sm:$0xf]
        %s416 = scalar_lea.vmem %s289, 2 [#allocation2]
        %v417 = vld [vmem:[%s416] ss:$8 sm:$0xf]
        %s418 = scalar_lea.vmem %s263, 64
        %v419 = vld [vmem:[%s418] sm:$0xff]
        %v420 = vld [vmem:[%s418 + $0x8] sm:$0xff]
        %v421 = vld [vmem:[%s418 + $0x10] sm:$0xff]
        %v422 = vld [vmem:[%s418 + $0x18] sm:$0xff]
        %s423 = scalar_lea.vmem %s263, 320
        %v424 = vld [vmem:[%s423] sm:$0xff]
        %v425 = vld [vmem:[%s423 + $0x8] sm:$0xff]
        %v426 = vld [vmem:[%s423 + $0x10] sm:$0xff]
        %v427 = vld [vmem:[%s423 + $0x18] sm:$0xff]
        %v429 = vperm.slane %v415, 0
        %v430 = vperm.slane %v415, 1
        %v431 = vperm.slane %v415, 2
        %v432 = vperm.slane %v415, 3
        %v437 = vmul.f32 %v429, %v419
        %v438 = vmul.f32 %v430, %v420
        %v439 = vmul.f32 %v431, %v421
        %v440 = vmul.f32 %v432, %v422
        %v441 = vadd.f32 %v394, %v437
        %v442 = vadd.f32 %v395, %v438
        %v443 = vadd.f32 %v396, %v439
        %v444 = vadd.f32 %v397, %v440
        %v446 = vperm.slane %v417, 0
        %v447 = vperm.slane %v417, 1
        %v448 = vperm.slane %v417, 2
        %v449 = vperm.slane %v417, 3
        %v454 = vmul.f32 %v446, %v424
        %v455 = vmul.f32 %v447, %v425
        %v456 = vmul.f32 %v448, %v426
        %v457 = vmul.f32 %v449, %v427
        %v458 = vsub.f32 %v441, %v454
        %v459 = vsub.f32 %v442, %v455
        %v460 = vsub.f32 %v443, %v456
        %v461 = vsub.f32 %v444, %v457
        %v462 = vmul.f32 %v429, %v424
        %v463 = vmul.f32 %v430, %v425
        %v464 = vmul.f32 %v431, %v426
        %v465 = vmul.f32 %v432, %v427
        %v466 = vadd.f32 %v410, %v462
        %v467 = vadd.f32 %v411, %v463
        %v468 = vadd.f32 %v412, %v464
        %v469 = vadd.f32 %v413, %v465
        %v470 = vmul.f32 %v446, %v419
        %v471 = vmul.f32 %v447, %v420
        %v472 = vmul.f32 %v448, %v421
        %v473 = vmul.f32 %v449, %v422
        %v474 = vadd.f32 %v466, %v470
        %v475 = vadd.f32 %v467, %v471
        %v476 = vadd.f32 %v468, %v472
        %v477 = vadd.f32 %v469, %v473
        %s478 = scalar_lea.vmem %s217, 3 [#allocation2]
        %v479 = vld [vmem:[%s478] ss:$8 sm:$0xf]
        %s480 = scalar_lea.vmem %s289, 3 [#allocation2]
        %v481 = vld [vmem:[%s480] ss:$8 sm:$0xf]
        %s482 = scalar_lea.vmem %s263, 96
        %v483 = vld [vmem:[%s482] sm:$0xff]
        %v484 = vld [vmem:[%s482 + $0x8] sm:$0xff]
        %v485 = vld [vmem:[%s482 + $0x10] sm:$0xff]
        %v486 = vld [vmem:[%s482 + $0x18] sm:$0xff]
        %s487 = scalar_lea.vmem %s263, 352
        %v488 = vld [vmem:[%s487] sm:$0xff]
        %v489 = vld [vmem:[%s487 + $0x8] sm:$0xff]
        %v490 = vld [vmem:[%s487 + $0x10] sm:$0xff]
        %v491 = vld [vmem:[%s487 + $0x18] sm:$0xff]
        %v493 = vperm.slane %v479, 0
        %v494 = vperm.slane %v479, 1
        %v495 = vperm.slane %v479, 2
        %v496 = vperm.slane %v479, 3
        %v501 = vmul.f32 %v493, %v483
        %v502 = vmul.f32 %v494, %v484
        %v503 = vmul.f32 %v495, %v485
        %v504 = vmul.f32 %v496, %v486
        %v505 = vadd.f32 %v458, %v501
        %v506 = vadd.f32 %v459, %v502
        %v507 = vadd.f32 %v460, %v503
        %v508 = vadd.f32 %v461, %v504
        %v510 = vperm.slane %v481, 0
        %v511 = vperm.slane %v481, 1
        %v512 = vperm.slane %v481, 2
        %v513 = vperm.slane %v481, 3
        %v518 = vmul.f32 %v510, %v488
        %v519 = vmul.f32 %v511, %v489
        %v520 = vmul.f32 %v512, %v490
        %v521 = vmul.f32 %v513, %v491
        %v522 = vsub.f32 %v505, %v518
        %v523 = vsub.f32 %v506, %v519
        %v524 = vsub.f32 %v507, %v520
        %v525 = vsub.f32 %v508, %v521
        %v526 = vmul.f32 %v493, %v488
        %v527 = vmul.f32 %v494, %v489
        %v528 = vmul.f32 %v495, %v490
        %v529 = vmul.f32 %v496, %v491
        %v530 = vadd.f32 %v474, %v526
        %v531 = vadd.f32 %v475, %v527
        %v532 = vadd.f32 %v476, %v528
        %v533 = vadd.f32 %v477, %v529
        %v534 = vmul.f32 %v510, %v483
        %v535 = vmul.f32 %v511, %v484
        %v536 = vmul.f32 %v512, %v485
        %v537 = vmul.f32 %v513, %v486
        %v538 = vadd.f32 %v530, %v534
        %v539 = vadd.f32 %v531, %v535
        %v540 = vadd.f32 %v532, %v536
        %v541 = vadd.f32 %v533, %v537
        %s542 = scalar_lea.vmem %s217, 4 [#allocation2]
        %v543 = vld [vmem:[%s542] ss:$8 sm:$0xf]
        %s544 = scalar_lea.vmem %s289, 4 [#allocation2]
        %v545 = vld [vmem:[%s544] ss:$8 sm:$0xf]
        %s546 = scalar_lea.vmem %s263, 128
        %v547 = vld [vmem:[%s546] sm:$0xff]
        %v548 = vld [vmem:[%s546 + $0x8] sm:$0xff]
        %v549 = vld [vmem:[%s546 + $0x10] sm:$0xff]
        %v550 = vld [vmem:[%s546 + $0x18] sm:$0xff]
        %s551 = scalar_lea.vmem %s263, 384
        %v552 = vld [vmem:[%s551] sm:$0xff]
        %v553 = vld [vmem:[%s551 + $0x8] sm:$0xff]
        %v554 = vld [vmem:[%s551 + $0x10] sm:$0xff]
        %v555 = vld [vmem:[%s551 + $0x18] sm:$0xff]
        %v557 = vperm.slane %v543, 0
        %v558 = vperm.slane %v543, 1
        %v559 = vperm.slane %v543, 2
        %v560 = vperm.slane %v543, 3
        %v565 = vmul.f32 %v557, %v547
        %v566 = vmul.f32 %v558, %v548
        %v567 = vmul.f32 %v559, %v549
        %v568 = vmul.f32 %v560, %v550
        %v569 = vadd.f32 %v522, %v565
        %v570 = vadd.f32 %v523, %v566
        %v571 = vadd.f32 %v524, %v567
        %v572 = vadd.f32 %v525, %v568
        %v574 = vperm.slane %v545, 0
        %v575 = vperm.slane %v545, 1
        %v576 = vperm.slane %v545, 2
        %v577 = vperm.slane %v545, 3
        %v582 = vmul.f32 %v574, %v552
        %v583 = vmul.f32 %v575, %v553
        %v584 = vmul.f32 %v576, %v554
        %v585 = vmul.f32 %v577, %v555
        %v586 = vsub.f32 %v569, %v582
        %v587 = vsub.f32 %v570, %v583
        %v588 = vsub.f32 %v571, %v584
        %v589 = vsub.f32 %v572, %v585
        %v590 = vmul.f32 %v557, %v552
        %v591 = vmul.f32 %v558, %v553
        %v592 = vmul.f32 %v559, %v554
        %v593 = vmul.f32 %v560, %v555
        %v594 = vadd.f32 %v538, %v590
        %v595 = vadd.f32 %v539, %v591
        %v596 = vadd.f32 %v540, %v592
        %v597 = vadd.f32 %v541, %v593
        %v598 = vmul.f32 %v574, %v547
        %v599 = vmul.f32 %v575, %v548
        %v600 = vmul.f32 %v576, %v549
        %v601 = vmul.f32 %v577, %v550
        %v602 = vadd.f32 %v594, %v598
        %v603 = vadd.f32 %v595, %v599
        %v604 = vadd.f32 %v596, %v600
        %v605 = vadd.f32 %v597, %v601
        %s606 = scalar_lea.vmem %s217, 5 [#allocation2]
        %v607 = vld [vmem:[%s606] ss:$8 sm:$0xf]
        %s608 = scalar_lea.vmem %s289, 5 [#allocation2]
        %v609 = vld [vmem:[%s608] ss:$8 sm:$0xf]
        %s610 = scalar_lea.vmem %s263, 160
        %v611 = vld [vmem:[%s610] sm:$0xff]
        %v612 = vld [vmem:[%s610 + $0x8] sm:$0xff]
        %v613 = vld [vmem:[%s610 + $0x10] sm:$0xff]
        %v614 = vld [vmem:[%s610 + $0x18] sm:$0xff]
        %s615 = scalar_lea.vmem %s263, 416
        %v616 = vld [vmem:[%s615] sm:$0xff]
        %v617 = vld [vmem:[%s615 + $0x8] sm:$0xff]
        %v618 = vld [vmem:[%s615 + $0x10] sm:$0xff]
        %v619 = vld [vmem:[%s615 + $0x18] sm:$0xff]
        %v621 = vperm.slane %v607, 0
        %v622 = vperm.slane %v607, 1
        %v623 = vperm.slane %v607, 2
        %v624 = vperm.slane %v607, 3
        %v629 = vmul.f32 %v621, %v611
        %v630 = vmul.f32 %v622, %v612
        %v631 = vmul.f32 %v623, %v613
        %v632 = vmul.f32 %v624, %v614
        %v633 = vadd.f32 %v586, %v629
        %v634 = vadd.f32 %v587, %v630
        %v635 = vadd.f32 %v588, %v631
        %v636 = vadd.f32 %v589, %v632
        %v638 = vperm.slane %v609, 0
        %v639 = vperm.slane %v609, 1
        %v640 = vperm.slane %v609, 2
        %v641 = vperm.slane %v609, 3
        %v646 = vmul.f32 %v638, %v616
        %v647 = vmul.f32 %v639, %v617
        %v648 = vmul.f32 %v640, %v618
        %v649 = vmul.f32 %v641, %v619
        %v650 = vsub.f32 %v633, %v646
        %v651 = vsub.f32 %v634, %v647
        %v652 = vsub.f32 %v635, %v648
        %v653 = vsub.f32 %v636, %v649
        %v654 = vmul.f32 %v621, %v616
        %v655 = vmul.f32 %v622, %v617
        %v656 = vmul.f32 %v623, %v618
        %v657 = vmul.f32 %v624, %v619
        %v658 = vadd.f32 %v602, %v654
        %v659 = vadd.f32 %v603, %v655
        %v660 = vadd.f32 %v604, %v656
        %v661 = vadd.f32 %v605, %v657
        %v662 = vmul.f32 %v638, %v611
        %v663 = vmul.f32 %v639, %v612
        %v664 = vmul.f32 %v640, %v613
        %v665 = vmul.f32 %v641, %v614
        %v666 = vadd.f32 %v658, %v662
        %v667 = vadd.f32 %v659, %v663
        %v668 = vadd.f32 %v660, %v664
        %v669 = vadd.f32 %v661, %v665
        %s670 = scalar_lea.vmem %s217, 6 [#allocation2]
        %v671 = vld [vmem:[%s670] ss:$8 sm:$0xf]
        %s672 = scalar_lea.vmem %s289, 6 [#allocation2]
        %v673 = vld [vmem:[%s672] ss:$8 sm:$0xf]
        %s674 = scalar_lea.vmem %s263, 192
        %v675 = vld [vmem:[%s674] sm:$0xff]
        %v676 = vld [vmem:[%s674 + $0x8] sm:$0xff]
        %v677 = vld [vmem:[%s674 + $0x10] sm:$0xff]
        %v678 = vld [vmem:[%s674 + $0x18] sm:$0xff]
        %s679 = scalar_lea.vmem %s263, 448
        %v680 = vld [vmem:[%s679] sm:$0xff]
        %v681 = vld [vmem:[%s679 + $0x8] sm:$0xff]
        %v682 = vld [vmem:[%s679 + $0x10] sm:$0xff]
        %v683 = vld [vmem:[%s679 + $0x18] sm:$0xff]
        %v685 = vperm.slane %v671, 0
        %v686 = vperm.slane %v671, 1
        %v687 = vperm.slane %v671, 2
        %v688 = vperm.slane %v671, 3
        %v693 = vmul.f32 %v685, %v675
        %v694 = vmul.f32 %v686, %v676
        %v695 = vmul.f32 %v687, %v677
        %v696 = vmul.f32 %v688, %v678
        %v697 = vadd.f32 %v650, %v693
        %v698 = vadd.f32 %v651, %v694
        %v699 = vadd.f32 %v652, %v695
        %v700 = vadd.f32 %v653, %v696
        %v702 = vperm.slane %v673, 0
        %v703 = vperm.slane %v673, 1
        %v704 = vperm.slane %v673, 2
        %v705 = vperm.slane %v673, 3
        %v710 = vmul.f32 %v702, %v680
        %v711 = vmul.f32 %v703, %v681
        %v712 = vmul.f32 %v704, %v682
        %v713 = vmul.f32 %v705, %v683
        %v714 = vsub.f32 %v697, %v710
        %v715 = vsub.f32 %v698, %v711
        %v716 = vsub.f32 %v699, %v712
        %v717 = vsub.f32 %v700, %v713
        %v718 = vmul.f32 %v685, %v680
        %v719 = vmul.f32 %v686, %v681
        %v720 = vmul.f32 %v687, %v682
        %v721 = vmul.f32 %v688, %v683
        %v722 = vadd.f32 %v666, %v718
        %v723 = vadd.f32 %v667, %v719
        %v724 = vadd.f32 %v668, %v720
        %v725 = vadd.f32 %v669, %v721
        %v726 = vmul.f32 %v702, %v675
        %v727 = vmul.f32 %v703, %v676
        %v728 = vmul.f32 %v704, %v677
        %v729 = vmul.f32 %v705, %v678
        %v730 = vadd.f32 %v722, %v726
        %v731 = vadd.f32 %v723, %v727
        %v732 = vadd.f32 %v724, %v728
        %v733 = vadd.f32 %v725, %v729
        %s734 = scalar_lea.vmem %s217, 7 [#allocation2]
        %v735 = vld [vmem:[%s734] ss:$8 sm:$0xf]
        %s736 = scalar_lea.vmem %s289, 7 [#allocation2]
        %v737 = vld [vmem:[%s736] ss:$8 sm:$0xf]
        %s738 = scalar_lea.vmem %s263, 224
        %v739 = vld [vmem:[%s738] sm:$0xff]
        %v740 = vld [vmem:[%s738 + $0x8] sm:$0xff]
        %v741 = vld [vmem:[%s738 + $0x10] sm:$0xff]
        %v742 = vld [vmem:[%s738 + $0x18] sm:$0xff]
        %s743 = scalar_lea.vmem %s263, 480
        %v744 = vld [vmem:[%s743] sm:$0xff]
        %v745 = vld [vmem:[%s743 + $0x8] sm:$0xff]
        %v746 = vld [vmem:[%s743 + $0x10] sm:$0xff]
        %v747 = vld [vmem:[%s743 + $0x18] sm:$0xff]
        %v749 = vperm.slane %v735, 0
        %v750 = vperm.slane %v735, 1
        %v751 = vperm.slane %v735, 2
        %v752 = vperm.slane %v735, 3
        %v757 = vmul.f32 %v749, %v739
        %v758 = vmul.f32 %v750, %v740
        %v759 = vmul.f32 %v751, %v741
        %v760 = vmul.f32 %v752, %v742
        %v761 = vadd.f32 %v714, %v757
        %v762 = vadd.f32 %v715, %v758
        %v763 = vadd.f32 %v716, %v759
        %v764 = vadd.f32 %v717, %v760
        %v766 = vperm.slane %v737, 0
        %v767 = vperm.slane %v737, 1
        %v768 = vperm.slane %v737, 2
        %v769 = vperm.slane %v737, 3
        %v774 = vmul.f32 %v766, %v744
        %v775 = vmul.f32 %v767, %v745
        %v776 = vmul.f32 %v768, %v746
        %v777 = vmul.f32 %v769, %v747
        %v778 = vsub.f32 %v761, %v774
        %v779 = vsub.f32 %v762, %v775
        %v780 = vsub.f32 %v763, %v776
        %v781 = vsub.f32 %v764, %v777
        %v782 = vmul.f32 %v749, %v744
        %v783 = vmul.f32 %v750, %v745
        %v784 = vmul.f32 %v751, %v746
        %v785 = vmul.f32 %v752, %v747
        %v786 = vadd.f32 %v730, %v782
        %v787 = vadd.f32 %v731, %v783
        %v788 = vadd.f32 %v732, %v784
        %v789 = vadd.f32 %v733, %v785
        %v790 = vmul.f32 %v766, %v739
        %v791 = vmul.f32 %v767, %v740
        %v792 = vmul.f32 %v768, %v741
        %v793 = vmul.f32 %v769, %v742
        %v794 = vadd.f32 %v786, %v790
        %v795 = vadd.f32 %v787, %v791
        %v796 = vadd.f32 %v788, %v792
        %v797 = vadd.f32 %v789, %v793
        %798 = vst [vmem:[%s248] sm:$0xff] %v778
        %799 = vst [vmem:[%s248 + $0x8] sm:$0xff] %v779
        %800 = vst [vmem:[%s248 + $0x10] sm:$0xff] %v780
        %801 = vst [vmem:[%s248 + $0x18] sm:$0xff] %v781
        %802 = vst [vmem:[%s283] sm:$0xff] %v794
        %803 = vst [vmem:[%s283 + $0x8] sm:$0xff] %v795
        %804 = vst [vmem:[%s283 + $0x10] sm:$0xff] %v796
        %805 = vst [vmem:[%s283 + $0x18] sm:$0xff] %v797
        %s806 = sand.u32 %s111, 1
        %s807 = sand.u32 %s111, 1
        %s808 = smul.addr %s807, 64
        %s809 = scalar_lea.vmem [#allocation3], %s808
        // Predicated region
        $region56: #{fourier_layer.1} parent=46 // pred_check
          %p810 = pneg %p121
        $region57: #{fourier_layer.1} parent=46 // pred_check_branch
          %812 = sbr.rel (%p810) target = $region59
        $region58: #{fourier_layer.1} parent=46 // pred_region
          %s813 = smul.u32 4, %s20
          %s814 = smul.addr %s21, 4
          %s815 = sadd.s32 %s813, %s814
          %s816 = smul.addr %s19, 4
          %s817 = sadd.s32 %s815, %s816
          %s818 = smul.addr %s817, 8
          %s819 = scalar_lea.vmem %s2, %s818
          // Predicated region
          $region60: #{fourier_layer.1} parent=58 // pred_check
            _
          $region61: #{fourier_layer.1} parent=58 // pred_check_branch
            %821 = sbr.rel (0) target = $region63
          $region62: #{fourier_layer.1} parent=58 // pred_region
            // Predicated region
            $region64: #{fourier_layer.1} parent=62 // pred_check
              _
            $region65: #{fourier_layer.1} parent=62 // pred_check_branch
              %823 = sbr.rel (0) target = $region67
            $region66: #{fourier_layer.1} parent=62 // pred_region
              loop: start=0, step=1, limit=1
              $region68: #{fourier_layer.1} parent=66 // loop_pre_header
                _
              $region69: #{fourier_layer.1} parent=66 // loop_header
                %s825 = sphi 0, %s829
                %p826 = scmp.ge.s32.totalorder %s825, 1
                %s830 = sphi %s809, %s809
                %s831 = sphi %s819, %s819
              $region70: #{fourier_layer.1} parent=66 // loop_header_branch
                %828 = sbr.rel (%p826) target = $region74
              $region71: #{fourier_layer.1} parent=66 // loop_body
                %v832 = vld [vmem:[%s830] sm:$0xff]
                %833 = vst [vmem:[%s831] sm:$0xff] %v832
                %v834 = vld [vmem:[%s830 + $0x8] sm:$0xff]
                %835 = vst [vmem:[%s831 + $0x8] sm:$0xff] %v834
                %v836 = vld [vmem:[%s830 + $0x10] sm:$0xff]
                %837 = vst [vmem:[%s831 + $0x10] sm:$0xff] %v836
                %v838 = vld [vmem:[%s830 + $0x18] sm:$0xff]
                %839 = vst [vmem:[%s831 + $0x18] sm:$0xff] %v838
                %v840 = vld [vmem:[%s830 + $0x20] sm:$0xff]
                %841 = vst [vmem:[%s831 + $0x40] sm:$0xff] %v840
                %v842 = vld [vmem:[%s830 + $0x28] sm:$0xff]
                %843 = vst [vmem:[%s831 + $0x48] sm:$0xff] %v842
                %v844 = vld [vmem:[%s830 + $0x30] sm:$0xff]
                %845 = vst [vmem:[%s831 + $0x50] sm:$0xff] %v844
                %v846 = vld [vmem:[%s830 + $0x38] sm:$0xff]
                %847 = vst [vmem:[%s831 + $0x58] sm:$0xff] %v846
              $region72: #{fourier_layer.1} parent=66 // loop_footer
                %s829 = sadd.s32 1, %s825
              $region73: #{fourier_layer.1} parent=66 // loop_footer_branch
                %824 = sbr.rel target = $region69
              $region74: #{fourier_layer.1} parent=66 // loop_exit
                _
            $region67: #{fourier_layer.1} parent=62 // pred_fallthru
              _
            // Predicated region
            $region75: #{fourier_layer.1} parent=62 // pred_check
              _
            $region76: #{fourier_layer.1} parent=62 // pred_check_branch
              %849 = sbr.rel target = $region78
            $region77: #{fourier_layer.1} parent=62 // pred_region
              _
            $region78: #{fourier_layer.1} parent=62 // pred_fallthru
              _
          $region63: #{fourier_layer.1} parent=58 // pred_fallthru
            _
          %850 = vnop
        $region59: #{fourier_layer.1} parent=46 // pred_fallthru
          _
      $region47: #{fourier_layer.1} parent=5 // pred_fallthru
        _
      %p851 = scmp.le.s32.totalorder 2, %s8
      // Predicated region
      $region79: #{fourier_layer.1} parent=5 // pred_check
        %p852 = pneg %p851
      $region80: #{fourier_layer.1} parent=5 // pred_check_branch
        %854 = sbr.rel (%p852) target = $region82
      $region81: #{fourier_layer.1} parent=5 // pred_region
        %s855 = ssub.s32 %s8, 2
        // Predicated region
        $region83: #{fourier_layer.1} parent=81 // pred_check
          %p856 = pneg %p127
        $region84: #{fourier_layer.1} parent=81 // pred_check_branch
          %858 = sbr.rel (%p856) target = $region86
        $region85: #{fourier_layer.1} parent=81 // pred_region
          %s859 = sand.u32 %s112, 1
          %s860 = sand.u32 %s112, 1
          %s861 = smul.addr %s860, 64
          %s862 = scalar_lea.vmem [#allocation3], %s861
        $region86: #{fourier_layer.1} parent=81 // pred_fallthru
          _
      $region82: #{fourier_layer.1} parent=5 // pred_fallthru
        _
    $region6: #{fourier_layer.1} parent=1 // loop_footer
      %s12 = sadd.s32 1, %s8
    $region7: #{fourier_layer.1} parent=1 // loop_footer_branch
      %7 = sbr.rel target = $region3
    $region8: #{fourier_layer.1} parent=1 // loop_exit
      _

</llo_original>
